<compile_context>
chip_gen: v7x
topology: tpu7x:2x2x1
jax: 0.10.0
libtpu: 0.0.40
codegen_flags: <defaults>
</compile_context>

<pallas_src>
import functools
import math

import jax
import jax.numpy as jnp
from jax.experimental import pallas as pl
from jax.experimental.pallas import tpu as pltpu


# ----------------------------- configuration -----------------------------
N_VOCAB = 50
EMB_DIM = 32
PAD_IDX = 0
MAX_SEQ_LEN = 16
DROPOUT = 0.1          # unused (training=False -> dropout is identity)
N_BLOCK = 2
ATTN_DIM = 16          # per-head key/query/value dim
N_HEAD = 2
FF_DIM = 64

BATCH = 2
SEQ = 8

LN_EPS = 1e-5          # torch.nn.LayerNorm default

HDK = N_HEAD * ATTN_DIM                       # 32
QKV_PAD = ((3 * HDK + 127) // 128) * 128      # 128: pad so w1 starts on a 128-lane boundary


# ----------------------------- fused Pallas kernel -----------------------------
def fused_encoder_kernel(x_ref, pos_ref, mask_ref, wa_ref, wb_ref, vec_ref, o_ref,
                         *, n_block, n_head, dk, ff_dim, qkv_pad):
    """Position-embedding add + N_BLOCK post-LN encoder blocks, fully fused.

    x_ref    : (B, S, D)                  f32  word embeddings
    pos_ref  : (S, D)                     f32  sinusoid table slice
    mask_ref : (B, 1, S)                  f32  1.0 = valid token, 0.0 = pad
    wa_ref   : (N_BLOCK, D, qkv_pad+FF)   f32  [ wq*scale | wk | wv | 0-pad ][ w1 ]
    wb_ref   : (N_BLOCK, HDK+FF, D)       f32  [ wo ; w2 ]
    vec_ref  : (N_BLOCK, 8, 128)          f32  rows: b_qkv | bo | g1 | be1 | bf1 | bf2 | g2 | be2
    o_ref    : (B, S, D)                  f32
    """
    B, S, D = x_ref.shape
    N = B * S
    hdk = n_head * dk

    # ---- position embedding add (broadcast table over batch), flatten to (N, D) ----
    x2 = (x_ref[...] + pos_ref[...][None, :, :]).reshape(N, D)            # (N, D) f32

    # ---- additive attention-mask bias, broadcast ONCE to the head-folded shape ----
    bias = jnp.where(mask_ref[...] > 0.0,
                     jnp.float32(0.0), jnp.float32(-1e9))                 # (B, 1, S)
    bias_b = jnp.broadcast_to(bias, (B, S, S))                            # (B, S, S)
    bias_g = jnp.concatenate([bias_b] * n_head, axis=0)                   # (H*B, S, S) head-major

    for blk in range(n_block):                                            # static unroll (N_BLOCK=2)
        wa = wa_ref[blk]            # (D, qkv_pad + ff)
        wb = wb_ref[blk]            # (hdk + ff, D)
        vec = vec_ref[blk]          # (8, 128)

        w_qkv = wa[:, 0:qkv_pad]                     # (D, 128)  aligned view
        w1 = wa[:, qkv_pad:qkv_pad + ff_dim]         # (D, 64)   starts at lane 128 -> aligned
        wo = wb[0:hdk, :]                            # (hdk, D)  sublane-aligned view
        w2 = wb[hdk:hdk + ff_dim, :]                 # (ff, D)   sublane-aligned view

        b_qkv = vec[0:1, :]                          # (1, 128)  [ bq*scale | bk | bv | 0 ]
        bo = vec[1:2, 0:D]
        g1 = vec[2:3, 0:D]
        be1 = vec[3:4, 0:D]
        bf1 = vec[4:5, 0:ff_dim]
        bf2 = vec[5:6, 0:D]
        g2 = vec[6:7, 0:D]
        be2 = vec[7:8, 0:D]

        # ---- fused Q/K/V projection: one MXU matmul (scale folded into wq/bq host-side) ----
        qkv = jnp.dot(x2, w_qkv, preferred_element_type=jnp.float32) + b_qkv   # (N, 128) f32
        qkv3 = qkv.reshape(B, S, qkv_pad)                                       # leading split only

        # ---- fold heads into the einsum batch (head-major grouping: g = h*B + b) ----
        q_g = jnp.concatenate(
            [qkv3[:, :, h * dk:(h + 1) * dk] for h in range(n_head)], axis=0)            # (G, S, dk)
        v_g = jnp.concatenate(
            [qkv3[:, :, 2 * hdk + h * dk:2 * hdk + (h + 1) * dk] for h in range(n_head)],
            axis=0)                                                                        # (G, S, dk)
        # transpose K ONCE per block; head slices along the (sublane) hdk axis are free views
        k_t = jnp.swapaxes(qkv3[:, :, hdk:2 * hdk], 1, 2)                                  # (B, hdk, S)
        k_t_g = jnp.concatenate(
            [k_t[:, h * dk:(h + 1) * dk, :] for h in range(n_head)], axis=0)               # (G, dk, S)

        # ---- single batched score matmul + one softmax chain over the whole (G,S,S) slab ----
        s = jnp.einsum('gqd,gdk->gqk', q_g, k_t_g,
                       preferred_element_type=jnp.float32) + bias_g                        # (G, S, S)
        m = jnp.max(s, axis=-1, keepdims=True)
        p = jnp.exp(s - m)
        denom = jnp.sum(p, axis=-1, keepdims=True)        # >= 1 thanks to max-subtraction
        p = p * pl.reciprocal(denom, approx=True)         # EUP approx reciprocal + VPU mul

        # ---- single batched PV matmul ----
        o_g = jnp.einsum('gqk,gkd->gqd', p, v_g, preferred_element_type=jnp.float32)       # (G, S, dk)

        # ---- merge heads onto the lane axis; ONE output-projection matmul against full wo ----
        o_cat = jnp.concatenate([o_g[h * B:(h + 1) * B] for h in range(n_head)], axis=-1)  # (B, S, hdk)
        attn = jnp.dot(o_cat.reshape(N, hdk), wo, preferred_element_type=jnp.float32) + bo

        # ---- residual + LayerNorm 1 (var = E[x^2] - mean^2: two independent reductions) ----
        h1 = attn + x2
        mu1 = jnp.mean(h1, axis=-1, keepdims=True)
        var1 = jnp.mean(h1 * h1, axis=-1, keepdims=True) - mu1 * mu1
        h1n = (h1 - mu1) * jax.lax.rsqrt(var1 + LN_EPS) * g1 + be1

        # ---- position-wise feed-forward ----
        f = jnp.dot(h1n, w1, preferred_element_type=jnp.float32) + bf1
        f = jnp.maximum(f, 0.0)
        f = jnp.dot(f, w2, preferred_element_type=jnp.float32) + bf2

        # ---- residual + LayerNorm 2 ----
        h2 = f + h1n
        mu2 = jnp.mean(h2, axis=-1, keepdims=True)
        var2 = jnp.mean(h2 * h2, axis=-1, keepdims=True) - mu2 * mu2
        x2 = (h2 - mu2) * jax.lax.rsqrt(var2 + LN_EPS) * g2 + be2

    o_ref[...] = x2.reshape(B, S, D)


# ----------------------------- wrapper -----------------------------
def fused_encoder(x_emb, pos, mask, wa, wb, vecs):
    B, S, D = x_emb.shape
    kernel = functools.partial(fused_encoder_kernel, n_block=N_BLOCK, n_head=N_HEAD,
                               dk=ATTN_DIM, ff_dim=FF_DIM, qkv_pad=QKV_PAD)
    # No grid: the whole problem (16x32 activations, <100 KB of parameters) fits in VMEM,
    # so a single invocation avoids per-grid-step bookkeeping and keeps the activation
    # resident between blocks.  (Do not split B*S=16 rows across v7x cores; only worth it
    # once B*S reaches ~256 rows.)
    vmem = pl.BlockSpec(memory_space=pltpu.MemorySpace.VMEM)
    return pl.pallas_call(
        kernel,
        out_shape=jax.ShapeDtypeStruct((B, S, D), jnp.float32),
        in_specs=[vmem] * 6,
        out_specs=vmem,
    )(x_emb, pos, mask, wa, wb, vecs)


# ----------------------------- parameter / table setup -----------------------------
def sinusoid_encoding_table(max_seq_len, emb_dim):
    # Faithful to the PyTorch code: the .div(...) result is discarded (not in-place), so the
    # table entries are just the raw position indices before sin/cos.
    pos = jnp.arange(max_seq_len, dtype=jnp.float32)[:, None]            # (L, 1)
    tbl = jnp.tile(pos, (1, emb_dim))                                    # (L, D)
    tbl = tbl.at[:, 0::2].set(jnp.sin(tbl[:, 0::2]))
    tbl = tbl.at[:, 1::2].set(jnp.cos(tbl[:, 1::2]))
    return tbl[None]                                                     # (1, L, D)


def init_params(key):
    keys = jax.random.split(key, 1 + N_BLOCK)

    # word embedding, padding_idx row zeroed (nn.Embedding padding_idx semantics)
    word_emb = 0.02 * jax.random.normal(keys[0], (N_VOCAB, EMB_DIM), jnp.float32)
    word_emb = word_emb.at[PAD_IDX].set(0.0)

    blocks = []
    for i in range(N_BLOCK):
        ks = jax.random.split(keys[1 + i], 8)
        blk = {
            "wq": 0.05 * jax.random.normal(ks[0], (EMB_DIM, HDK), jnp.float32),
            "bq": jnp.zeros((1, HDK), jnp.float32),
            "wk": 0.05 * jax.random.normal(ks[1], (EMB_DIM, HDK), jnp.float32),
            "bk": jnp.zeros((1, HDK), jnp.float32),
            "wv": 0.05 * jax.random.normal(ks[2], (EMB_DIM, HDK), jnp.float32),
            "bv": jnp.zeros((1, HDK), jnp.float32),
            "wo": 0.05 * jax.random.normal(ks[3], (HDK, EMB_DIM), jnp.float32),
            "bo": jnp.zeros((1, EMB_DIM), jnp.float32),
            "g1": jnp.ones((1, EMB_DIM), jnp.float32),
            "be1": jnp.zeros((1, EMB_DIM), jnp.float32),
            "w1": 0.05 * jax.random.normal(ks[4], (EMB_DIM, FF_DIM), jnp.float32),
            "bf1": jnp.zeros((1, FF_DIM), jnp.float32),
            "w2": 0.05 * jax.random.normal(ks[5], (FF_DIM, EMB_DIM), jnp.float32),
            "bf2": jnp.zeros((1, EMB_DIM), jnp.float32),
            "g2": jnp.ones((1, EMB_DIM), jnp.float32),
            "be2": jnp.zeros((1, EMB_DIM), jnp.float32),
        }
        blocks.append(blk)
    return {"word_emb": word_emb, "blocks": blocks}


def pack_blocks(blocks):
    """Pack the 18 per-block tensors into 3 tile-aligned slabs per block (stacked over N_BLOCK).

    The 1/sqrt(dk) attention scale is folded into wq AND bq (equivalent to scaling q@k^T).
    Everything stays f32 (per the v5e review item: bf16 casts are pure overhead at this size).
    """
    scale = 1.0 / math.sqrt(ATTN_DIM)

    def row(v, width=128):
        v = v.reshape(1, -1)
        return jnp.pad(v, ((0, 0), (0, width - v.shape[1])))

    was, wbs, vecs = [], [], []
    for blk in blocks:
        w_qkv = jnp.concatenate([blk["wq"] * scale, blk["wk"], blk["wv"]], axis=1)   # (D, 96)
        w_qkv = jnp.pad(w_qkv, ((0, 0), (0, QKV_PAD - 3 * HDK)))                     # (D, 128)
        wa = jnp.concatenate([w_qkv, blk["w1"]], axis=1)                             # (D, 192)
        wb = jnp.concatenate([blk["wo"], blk["w2"]], axis=0)                         # (96, D)
        vec = jnp.concatenate([
            row(jnp.concatenate([blk["bq"] * scale, blk["bk"], blk["bv"]], axis=1)),  # row 0
            row(blk["bo"]), row(blk["g1"]), row(blk["be1"]),
            row(blk["bf1"]), row(blk["bf2"]), row(blk["g2"]), row(blk["be2"]),
        ], axis=0)                                                                    # (8, 128)
        was.append(wa)
        wbs.append(wb)
        vecs.append(vec)
    return (jnp.stack(was).astype(jnp.float32),
            jnp.stack(wbs).astype(jnp.float32),
            jnp.stack(vecs).astype(jnp.float32))


# ----------------------------- forward -----------------------------
@jax.jit
def encoder_forward(src_seq, src_mask, word_emb, emb_table, wa, wb, vecs):
    # word embedding lookup (data-dependent gather = glue, done in plain JAX)
    x = jnp.take(word_emb, src_seq, axis=0)                              # (B, S, D)
    pos = emb_table[0, :src_seq.shape[1], :]                             # (S, D)
    # training=False -> dropout is identity
    return fused_encoder(x, pos, src_mask, wa, wb, vecs)


# ----------------------------- main -----------------------------
if __name__ == "__main__":
    key = jax.random.PRNGKey(0)
    k_param, k_seq = jax.random.split(key)

    params = init_params(k_param)
    emb_table = sinusoid_encoding_table(MAX_SEQ_LEN, EMB_DIM)
    wa, wb, vecs = pack_blocks(params["blocks"])

    # deterministic token ids in [1, N_VOCAB), with the last two positions of batch element 1
    # set to PAD to exercise masking
    src_seq = jax.random.randint(k_seq, (BATCH, SEQ), 1, N_VOCAB, dtype=jnp.int32)
    src_seq = src_seq.at[1, -2:].set(PAD_IDX)
    src_mask = (src_seq != PAD_IDX).astype(jnp.float32)[:, None, :]      # (B, 1, S)

    out = encoder_forward(src_seq, src_mask, params["word_emb"], emb_table, wa, wb, vecs)
    out = jax.block_until_ready(out)

    assert out.shape == (BATCH, SEQ, EMB_DIM), out.shape
    assert bool(jnp.all(jnp.isfinite(out)))
    print("KERNEL_OK")
</pallas_src>

<mosaic_0001>
module attributes {stable_mosaic.version = 11 : i64} {
  func.func @fused_encoder_kernel(%arg0: memref<2x8x32xf32, #tpu.memory_space<vmem>>, %arg1: memref<8x32xf32, #tpu.memory_space<vmem>>, %arg2: memref<2x1x8xf32, #tpu.memory_space<vmem>>, %arg3: memref<2x32x192xf32, #tpu.memory_space<vmem>>, %arg4: memref<2x96x32xf32, #tpu.memory_space<vmem>>, %arg5: memref<2x8x128xf32, #tpu.memory_space<vmem>>, %arg6: memref<2x8x32xf32, #tpu.memory_space<vmem>>) attributes {dimension_semantics = [], scalar_prefetch = 0 : i64, scratch_operands = 0 : i64, tpu.core_type = #tpu.core_type<tc>} {
    %c0 = arith.constant 0 : index
    %c0_0 = arith.constant 0 : index
    %c0_1 = arith.constant 0 : index
    %0 = vector.load %arg0[%c0, %c0_0, %c0_1] : memref<2x8x32xf32, #tpu.memory_space<vmem>>, vector<2x8x32xf32>
    %c0_2 = arith.constant 0 : index
    %c0_3 = arith.constant 0 : index
    %1 = vector.load %arg1[%c0_2, %c0_3] : memref<8x32xf32, #tpu.memory_space<vmem>>, vector<8x32xf32>
    %2 = vector.shape_cast %1 : vector<8x32xf32> to vector<1x8x32xf32>
    %3 = vector.broadcast %2 : vector<1x8x32xf32> to vector<2x8x32xf32>
    %4 = arith.addf %0, %3 : vector<2x8x32xf32>
    %5 = vector.shape_cast %4 : vector<2x8x32xf32> to vector<16x32xf32>
    %c0_4 = arith.constant 0 : index
    %c0_5 = arith.constant 0 : index
    %c0_6 = arith.constant 0 : index
    %6 = vector.load %arg2[%c0_4, %c0_5, %c0_6] : memref<2x1x8xf32, #tpu.memory_space<vmem>>, vector<2x1x8xf32>
    %cst = arith.constant 0.000000e+00 : f32
    %7 = vector.broadcast %cst : f32 to vector<2x1x8xf32>
    %8 = arith.cmpf ogt, %6, %7 : vector<2x1x8xf32>
    %cst_7 = arith.constant 0.000000e+00 : f32
    %cst_8 = arith.constant -1.000000e+09 : f32
    %9 = vector.broadcast %cst_7 : f32 to vector<2x1x8xf32>
    %10 = vector.broadcast %cst_8 : f32 to vector<2x1x8xf32>
    %11 = arith.select %8, %9, %10 : vector<2x1x8xi1>, vector<2x1x8xf32>
    %12 = vector.shape_cast %11 : vector<2x1x8xf32> to vector<2x1x8xf32>
    %13 = vector.broadcast %12 : vector<2x1x8xf32> to vector<2x8x8xf32>
    %14 = tpu.concatenate %13, %13 in 0 : vector<2x8x8xf32>, vector<2x8x8xf32> -> vector<4x8x8xf32>
    %c0_9 = arith.constant 0 : index
    %c0_10 = arith.constant 0 : index
    %c0_11 = arith.constant 0 : index
    %15 = vector.load %arg3[%c0_9, %c0_10, %c0_11] : memref<2x32x192xf32, #tpu.memory_space<vmem>>, vector<1x32x192xf32>
    %16 = vector.shape_cast %15 : vector<1x32x192xf32> to vector<32x192xf32>
    %c0_12 = arith.constant 0 : index
    %c0_13 = arith.constant 0 : index
    %c0_14 = arith.constant 0 : index
    %17 = vector.load %arg4[%c0_12, %c0_13, %c0_14] : memref<2x96x32xf32, #tpu.memory_space<vmem>>, vector<1x96x32xf32>
    %18 = vector.shape_cast %17 : vector<1x96x32xf32> to vector<96x32xf32>
    %c0_15 = arith.constant 0 : index
    %c0_16 = arith.constant 0 : index
    %c0_17 = arith.constant 0 : index
    %19 = vector.load %arg5[%c0_15, %c0_16, %c0_17] : memref<2x8x128xf32, #tpu.memory_space<vmem>>, vector<1x8x128xf32>
    %20 = vector.shape_cast %19 : vector<1x8x128xf32> to vector<8x128xf32>
    %21 = vector.extract_strided_slice %16 {offsets = [0, 0], sizes = [32, 128], strides = [1, 1]} : vector<32x192xf32> to vector<32x128xf32>
    %22 = vector.extract_strided_slice %16 {offsets = [0, 128], sizes = [32, 64], strides = [1, 1]} : vector<32x192xf32> to vector<32x64xf32>
    %23 = vector.extract_strided_slice %18 {offsets = [0, 0], sizes = [32, 32], strides = [1, 1]} : vector<96x32xf32> to vector<32x32xf32>
    %24 = vector.extract_strided_slice %18 {offsets = [32, 0], sizes = [64, 32], strides = [1, 1]} : vector<96x32xf32> to vector<64x32xf32>
    %25 = vector.extract_strided_slice %20 {offsets = [0, 0], sizes = [1, 128], strides = [1, 1]} : vector<8x128xf32> to vector<1x128xf32>
    %26 = vector.extract_strided_slice %20 {offsets = [1, 0], sizes = [1, 32], strides = [1, 1]} : vector<8x128xf32> to vector<1x32xf32>
    %27 = vector.extract_strided_slice %20 {offsets = [2, 0], sizes = [1, 32], strides = [1, 1]} : vector<8x128xf32> to vector<1x32xf32>
    %28 = vector.extract_strided_slice %20 {offsets = [3, 0], sizes = [1, 32], strides = [1, 1]} : vector<8x128xf32> to vector<1x32xf32>
    %29 = vector.extract_strided_slice %20 {offsets = [4, 0], sizes = [1, 64], strides = [1, 1]} : vector<8x128xf32> to vector<1x64xf32>
    %30 = vector.extract_strided_slice %20 {offsets = [5, 0], sizes = [1, 32], strides = [1, 1]} : vector<8x128xf32> to vector<1x32xf32>
    %31 = vector.extract_strided_slice %20 {offsets = [6, 0], sizes = [1, 32], strides = [1, 1]} : vector<8x128xf32> to vector<1x32xf32>
    %32 = vector.extract_strided_slice %20 {offsets = [7, 0], sizes = [1, 32], strides = [1, 1]} : vector<8x128xf32> to vector<1x32xf32>
    %cst_18 = arith.constant dense<0.000000e+00> : vector<16x128xf32>
    %33 = tpu.matmul %5, %21, %cst_18 {dimension_numbers = #tpu.dot_dimension_numbers<[1], [0], [0], [1], [0, 0, 1, 1], [], []>} : vector<16x32xf32>, vector<32x128xf32>, vector<16x128xf32> -> vector<16x128xf32>
    %34 = vector.broadcast %25 : vector<1x128xf32> to vector<16x128xf32>
    %35 = arith.addf %33, %34 : vector<16x128xf32>
    %36 = vector.shape_cast %35 : vector<16x128xf32> to vector<2x8x128xf32>
    %37 = vector.extract_strided_slice %36 {offsets = [0, 0, 0], sizes = [2, 8, 16], strides = [1, 1, 1]} : vector<2x8x128xf32> to vector<2x8x16xf32>
    %38 = vector.extract_strided_slice %36 {offsets = [0, 0, 16], sizes = [2, 8, 16], strides = [1, 1, 1]} : vector<2x8x128xf32> to vector<2x8x16xf32>
    %39 = tpu.concatenate %37, %38 in 0 : vector<2x8x16xf32>, vector<2x8x16xf32> -> vector<4x8x16xf32>
    %40 = vector.extract_strided_slice %36 {offsets = [0, 0, 64], sizes = [2, 8, 16], strides = [1, 1, 1]} : vector<2x8x128xf32> to vector<2x8x16xf32>
    %41 = vector.extract_strided_slice %36 {offsets = [0, 0, 80], sizes = [2, 8, 16], strides = [1, 1, 1]} : vector<2x8x128xf32> to vector<2x8x16xf32>
    %42 = tpu.concatenate %40, %41 in 0 : vector<2x8x16xf32>, vector<2x8x16xf32> -> vector<4x8x16xf32>
    %43 = vector.extract_strided_slice %36 {offsets = [0, 0, 32], sizes = [2, 8, 32], strides = [1, 1, 1]} : vector<2x8x128xf32> to vector<2x8x32xf32>
    %44 = tpu.transpose %43, [0, 2, 1] : vector<2x8x32xf32> -> vector<2x32x8xf32>
    %45 = vector.extract_strided_slice %44 {offsets = [0, 0, 0], sizes = [2, 16, 8], strides = [1, 1, 1]} : vector<2x32x8xf32> to vector<2x16x8xf32>
    %46 = vector.extract_strided_slice %44 {offsets = [0, 16, 0], sizes = [2, 16, 8], strides = [1, 1, 1]} : vector<2x32x8xf32> to vector<2x16x8xf32>
    %47 = tpu.concatenate %45, %46 in 0 : vector<2x16x8xf32>, vector<2x16x8xf32> -> vector<4x16x8xf32>
    "tpu.trace_start"() <{level = 10 : i32, message = "gqd,gdk->gqk"}> : () -> ()
    %cst_19 = arith.constant dense<0.000000e+00> : vector<4x8x8xf32>
    %48 = tpu.matmul %39, %47, %cst_19 {dimension_numbers = #tpu.dot_dimension_numbers<[2], [1], [1], [2], [0, 0, 0, 1, 1, 2], [0], [0]>} : vector<4x8x16xf32>, vector<4x16x8xf32>, vector<4x8x8xf32> -> vector<4x8x8xf32>
    "tpu.trace_stop"() : () -> ()
    %49 = arith.addf %48, %14 : vector<4x8x8xf32>
    %cst_20 = arith.constant dense<0xFF800000> : vector<4x8xf32>
    %50 = vector.multi_reduction <maximumf>, %49, %cst_20 [2] : vector<4x8x8xf32> to vector<4x8xf32>
    %51 = vector.shape_cast %50 : vector<4x8xf32> to vector<4x8x1xf32>
    %52 = vector.broadcast %51 : vector<4x8x1xf32> to vector<4x8x8xf32>
    %53 = arith.subf %49, %52 : vector<4x8x8xf32>
    %54 = math.exp %53 : vector<4x8x8xf32>
    %cst_21 = arith.constant dense<0.000000e+00> : vector<4x8xf32>
    %55 = vector.multi_reduction <add>, %54, %cst_21 [2] : vector<4x8x8xf32> to vector<4x8xf32>
    %56 = vector.shape_cast %55 : vector<4x8xf32> to vector<4x8x1xf32>
    %57 = tpu.reciprocal %56 {approx = true} : vector<4x8x1xf32> -> vector<4x8x1xf32>
    %58 = vector.broadcast %57 : vector<4x8x1xf32> to vector<4x8x8xf32>
    %59 = arith.mulf %54, %58 : vector<4x8x8xf32>
    "tpu.trace_start"() <{level = 10 : i32, message = "gqk,gkd->gqd"}> : () -> ()
    %cst_22 = arith.constant dense<0.000000e+00> : vector<4x8x16xf32>
    %60 = tpu.matmul %59, %42, %cst_22 {dimension_numbers = #tpu.dot_dimension_numbers<[2], [1], [1], [2], [0, 0, 0, 1, 1, 2], [0], [0]>} : vector<4x8x8xf32>, vector<4x8x16xf32>, vector<4x8x16xf32> -> vector<4x8x16xf32>
    "tpu.trace_stop"() : () -> ()
    %61 = vector.extract_strided_slice %60 {offsets = [0, 0, 0], sizes = [2, 8, 16], strides = [1, 1, 1]} : vector<4x8x16xf32> to vector<2x8x16xf32>
    %62 = vector.extract_strided_slice %60 {offsets = [2, 0, 0], sizes = [2, 8, 16], strides = [1, 1, 1]} : vector<4x8x16xf32> to vector<2x8x16xf32>
    %63 = tpu.concatenate %61, %62 in 2 : vector<2x8x16xf32>, vector<2x8x16xf32> -> vector<2x8x32xf32>
    %64 = vector.shape_cast %63 : vector<2x8x32xf32> to vector<16x32xf32>
    %cst_23 = arith.constant dense<0.000000e+00> : vector<16x32xf32>
    %65 = tpu.matmul %64, %23, %cst_23 {dimension_numbers = #tpu.dot_dimension_numbers<[1], [0], [0], [1], [0, 0, 1, 1], [], []>} : vector<16x32xf32>, vector<32x32xf32>, vector<16x32xf32> -> vector<16x32xf32>
    %66 = vector.broadcast %26 : vector<1x32xf32> to vector<16x32xf32>
    %67 = arith.addf %65, %66 : vector<16x32xf32>
    %68 = arith.addf %67, %5 : vector<16x32xf32>
    %cst_24 = arith.constant dense<0.000000e+00> : vector<16xf32>
    %69 = vector.multi_reduction <add>, %68, %cst_24 [1] : vector<16x32xf32> to vector<16xf32>
    %70 = vector.shape_cast %69 : vector<16xf32> to vector<16x1xf32>
    %cst_25 = arith.constant 3.200000e+01 : f32
    %71 = vector.broadcast %cst_25 : f32 to vector<16x1xf32>
    %72 = arith.divf %70, %71 : vector<16x1xf32>
    %73 = arith.mulf %68, %68 : vector<16x32xf32>
    %cst_26 = arith.constant dense<0.000000e+00> : vector<16xf32>
    %74 = vector.multi_reduction <add>, %73, %cst_26 [1] : vector<16x32xf32> to vector<16xf32>
    %75 = vector.shape_cast %74 : vector<16xf32> to vector<16x1xf32>
    %cst_27 = arith.constant 3.200000e+01 : f32
    %76 = vector.broadcast %cst_27 : f32 to vector<16x1xf32>
    %77 = arith.divf %75, %76 : vector<16x1xf32>
    %78 = arith.mulf %72, %72 : vector<16x1xf32>
    %79 = arith.subf %77, %78 : vector<16x1xf32>
    %80 = vector.broadcast %72 : vector<16x1xf32> to vector<16x32xf32>
    %81 = arith.subf %68, %80 : vector<16x32xf32>
    %cst_28 = arith.constant 9.99999974E-6 : f32
    %82 = vector.broadcast %cst_28 : f32 to vector<16x1xf32>
    %83 = arith.addf %79, %82 : vector<16x1xf32>
    %84 = math.rsqrt %83 : vector<16x1xf32>
    %85 = vector.broadcast %84 : vector<16x1xf32> to vector<16x32xf32>
    %86 = arith.mulf %81, %85 : vector<16x32xf32>
    %87 = vector.broadcast %27 : vector<1x32xf32> to vector<16x32xf32>
    %88 = arith.mulf %86, %87 : vector<16x32xf32>
    %89 = vector.broadcast %28 : vector<1x32xf32> to vector<16x32xf32>
    %90 = arith.addf %88, %89 : vector<16x32xf32>
    %cst_29 = arith.constant dense<0.000000e+00> : vector<16x64xf32>
    %91 = tpu.matmul %90, %22, %cst_29 {dimension_numbers = #tpu.dot_dimension_numbers<[1], [0], [0], [1], [0, 0, 1, 1], [], []>} : vector<16x32xf32>, vector<32x64xf32>, vector<16x64xf32> -> vector<16x64xf32>
    %92 = vector.broadcast %29 : vector<1x64xf32> to vector<16x64xf32>
    %93 = arith.addf %91, %92 : vector<16x64xf32>
    %cst_30 = arith.constant 0.000000e+00 : f32
    %94 = vector.broadcast %cst_30 : f32 to vector<16x64xf32>
    %95 = arith.maximumf %93, %94 : vector<16x64xf32>
    %cst_31 = arith.constant dense<0.000000e+00> : vector<16x32xf32>
    %96 = tpu.matmul %95, %24, %cst_31 {dimension_numbers = #tpu.dot_dimension_numbers<[1], [0], [0], [1], [0, 0, 1, 1], [], []>} : vector<16x64xf32>, vector<64x32xf32>, vector<16x32xf32> -> vector<16x32xf32>
    %97 = vector.broadcast %30 : vector<1x32xf32> to vector<16x32xf32>
    %98 = arith.addf %96, %97 : vector<16x32xf32>
    %99 = arith.addf %98, %90 : vector<16x32xf32>
    %cst_32 = arith.constant dense<0.000000e+00> : vector<16xf32>
    %100 = vector.multi_reduction <add>, %99, %cst_32 [1] : vector<16x32xf32> to vector<16xf32>
    %101 = vector.shape_cast %100 : vector<16xf32> to vector<16x1xf32>
    %cst_33 = arith.constant 3.200000e+01 : f32
    %102 = vector.broadcast %cst_33 : f32 to vector<16x1xf32>
    %103 = arith.divf %101, %102 : vector<16x1xf32>
    %104 = arith.mulf %99, %99 : vector<16x32xf32>
    %cst_34 = arith.constant dense<0.000000e+00> : vector<16xf32>
    %105 = vector.multi_reduction <add>, %104, %cst_34 [1] : vector<16x32xf32> to vector<16xf32>
    %106 = vector.shape_cast %105 : vector<16xf32> to vector<16x1xf32>
    %cst_35 = arith.constant 3.200000e+01 : f32
    %107 = vector.broadcast %cst_35 : f32 to vector<16x1xf32>
    %108 = arith.divf %106, %107 : vector<16x1xf32>
    %109 = arith.mulf %103, %103 : vector<16x1xf32>
    %110 = arith.subf %108, %109 : vector<16x1xf32>
    %111 = vector.broadcast %103 : vector<16x1xf32> to vector<16x32xf32>
    %112 = arith.subf %99, %111 : vector<16x32xf32>
    %cst_36 = arith.constant 9.99999974E-6 : f32
    %113 = vector.broadcast %cst_36 : f32 to vector<16x1xf32>
    %114 = arith.addf %110, %113 : vector<16x1xf32>
    %115 = math.rsqrt %114 : vector<16x1xf32>
    %116 = vector.broadcast %115 : vector<16x1xf32> to vector<16x32xf32>
    %117 = arith.mulf %112, %116 : vector<16x32xf32>
    %118 = vector.broadcast %31 : vector<1x32xf32> to vector<16x32xf32>
    %119 = arith.mulf %117, %118 : vector<16x32xf32>
    %120 = vector.broadcast %32 : vector<1x32xf32> to vector<16x32xf32>
    %121 = arith.addf %119, %120 : vector<16x32xf32>
    %c1 = arith.constant 1 : index
    %c0_37 = arith.constant 0 : index
    %c0_38 = arith.constant 0 : index
    %122 = vector.load %arg3[%c1, %c0_37, %c0_38] : memref<2x32x192xf32, #tpu.memory_space<vmem>>, vector<1x32x192xf32>
    %123 = vector.shape_cast %122 : vector<1x32x192xf32> to vector<32x192xf32>
    %c1_39 = arith.constant 1 : index
    %c0_40 = arith.constant 0 : index
    %c0_41 = arith.constant 0 : index
    %124 = vector.load %arg4[%c1_39, %c0_40, %c0_41] : memref<2x96x32xf32, #tpu.memory_space<vmem>>, vector<1x96x32xf32>
    %125 = vector.shape_cast %124 : vector<1x96x32xf32> to vector<96x32xf32>
    %c1_42 = arith.constant 1 : index
    %c0_43 = arith.constant 0 : index
    %c0_44 = arith.constant 0 : index
    %126 = vector.load %arg5[%c1_42, %c0_43, %c0_44] : memref<2x8x128xf32, #tpu.memory_space<vmem>>, vector<1x8x128xf32>
    %127 = vector.shape_cast %126 : vector<1x8x128xf32> to vector<8x128xf32>
    %128 = vector.extract_strided_slice %123 {offsets = [0, 0], sizes = [32, 128], strides = [1, 1]} : vector<32x192xf32> to vector<32x128xf32>
    %129 = vector.extract_strided_slice %123 {offsets = [0, 128], sizes = [32, 64], strides = [1, 1]} : vector<32x192xf32> to vector<32x64xf32>
    %130 = vector.extract_strided_slice %125 {offsets = [0, 0], sizes = [32, 32], strides = [1, 1]} : vector<96x32xf32> to vector<32x32xf32>
    %131 = vector.extract_strided_slice %125 {offsets = [32, 0], sizes = [64, 32], strides = [1, 1]} : vector<96x32xf32> to vector<64x32xf32>
    %132 = vector.extract_strided_slice %127 {offsets = [0, 0], sizes = [1, 128], strides = [1, 1]} : vector<8x128xf32> to vector<1x128xf32>
    %133 = vector.extract_strided_slice %127 {offsets = [1, 0], sizes = [1, 32], strides = [1, 1]} : vector<8x128xf32> to vector<1x32xf32>
    %134 = vector.extract_strided_slice %127 {offsets = [2, 0], sizes = [1, 32], strides = [1, 1]} : vector<8x128xf32> to vector<1x32xf32>
    %135 = vector.extract_strided_slice %127 {offsets = [3, 0], sizes = [1, 32], strides = [1, 1]} : vector<8x128xf32> to vector<1x32xf32>
    %136 = vector.extract_strided_slice %127 {offsets = [4, 0], sizes = [1, 64], strides = [1, 1]} : vector<8x128xf32> to vector<1x64xf32>
    %137 = vector.extract_strided_slice %127 {offsets = [5, 0], sizes = [1, 32], strides = [1, 1]} : vector<8x128xf32> to vector<1x32xf32>
    %138 = vector.extract_strided_slice %127 {offsets = [6, 0], sizes = [1, 32], strides = [1, 1]} : vector<8x128xf32> to vector<1x32xf32>
    %139 = vector.extract_strided_slice %127 {offsets = [7, 0], sizes = [1, 32], strides = [1, 1]} : vector<8x128xf32> to vector<1x32xf32>
    %cst_45 = arith.constant dense<0.000000e+00> : vector<16x128xf32>
    %140 = tpu.matmul %121, %128, %cst_45 {dimension_numbers = #tpu.dot_dimension_numbers<[1], [0], [0], [1], [0, 0, 1, 1], [], []>} : vector<16x32xf32>, vector<32x128xf32>, vector<16x128xf32> -> vector<16x128xf32>
    %141 = vector.broadcast %132 : vector<1x128xf32> to vector<16x128xf32>
    %142 = arith.addf %140, %141 : vector<16x128xf32>
    %143 = vector.shape_cast %142 : vector<16x128xf32> to vector<2x8x128xf32>
    %144 = vector.extract_strided_slice %143 {offsets = [0, 0, 0], sizes = [2, 8, 16], strides = [1, 1, 1]} : vector<2x8x128xf32> to vector<2x8x16xf32>
    %145 = vector.extract_strided_slice %143 {offsets = [0, 0, 16], sizes = [2, 8, 16], strides = [1, 1, 1]} : vector<2x8x128xf32> to vector<2x8x16xf32>
    %146 = tpu.concatenate %144, %145 in 0 : vector<2x8x16xf32>, vector<2x8x16xf32> -> vector<4x8x16xf32>
    %147 = vector.extract_strided_slice %143 {offsets = [0, 0, 64], sizes = [2, 8, 16], strides = [1, 1, 1]} : vector<2x8x128xf32> to vector<2x8x16xf32>
    %148 = vector.extract_strided_slice %143 {offsets = [0, 0, 80], sizes = [2, 8, 16], strides = [1, 1, 1]} : vector<2x8x128xf32> to vector<2x8x16xf32>
    %149 = tpu.concatenate %147, %148 in 0 : vector<2x8x16xf32>, vector<2x8x16xf32> -> vector<4x8x16xf32>
    %150 = vector.extract_strided_slice %143 {offsets = [0, 0, 32], sizes = [2, 8, 32], strides = [1, 1, 1]} : vector<2x8x128xf32> to vector<2x8x32xf32>
    %151 = tpu.transpose %150, [0, 2, 1] : vector<2x8x32xf32> -> vector<2x32x8xf32>
    %152 = vector.extract_strided_slice %151 {offsets = [0, 0, 0], sizes = [2, 16, 8], strides = [1, 1, 1]} : vector<2x32x8xf32> to vector<2x16x8xf32>
    %153 = vector.extract_strided_slice %151 {offsets = [0, 16, 0], sizes = [2, 16, 8], strides = [1, 1, 1]} : vector<2x32x8xf32> to vector<2x16x8xf32>
    %154 = tpu.concatenate %152, %153 in 0 : vector<2x16x8xf32>, vector<2x16x8xf32> -> vector<4x16x8xf32>
    "tpu.trace_start"() <{level = 10 : i32, message = "gqd,gdk->gqk"}> : () -> ()
    %cst_46 = arith.constant dense<0.000000e+00> : vector<4x8x8xf32>
    %155 = tpu.matmul %146, %154, %cst_46 {dimension_numbers = #tpu.dot_dimension_numbers<[2], [1], [1], [2], [0, 0, 0, 1, 1, 2], [0], [0]>} : vector<4x8x16xf32>, vector<4x16x8xf32>, vector<4x8x8xf32> -> vector<4x8x8xf32>
    "tpu.trace_stop"() : () -> ()
    %156 = arith.addf %155, %14 : vector<4x8x8xf32>
    %cst_47 = arith.constant dense<0xFF800000> : vector<4x8xf32>
    %157 = vector.multi_reduction <maximumf>, %156, %cst_47 [2] : vector<4x8x8xf32> to vector<4x8xf32>
    %158 = vector.shape_cast %157 : vector<4x8xf32> to vector<4x8x1xf32>
    %159 = vector.broadcast %158 : vector<4x8x1xf32> to vector<4x8x8xf32>
    %160 = arith.subf %156, %159 : vector<4x8x8xf32>
    %161 = math.exp %160 : vector<4x8x8xf32>
    %cst_48 = arith.constant dense<0.000000e+00> : vector<4x8xf32>
    %162 = vector.multi_reduction <add>, %161, %cst_48 [2] : vector<4x8x8xf32> to vector<4x8xf32>
    %163 = vector.shape_cast %162 : vector<4x8xf32> to vector<4x8x1xf32>
    %164 = tpu.reciprocal %163 {approx = true} : vector<4x8x1xf32> -> vector<4x8x1xf32>
    %165 = vector.broadcast %164 : vector<4x8x1xf32> to vector<4x8x8xf32>
    %166 = arith.mulf %161, %165 : vector<4x8x8xf32>
    "tpu.trace_start"() <{level = 10 : i32, message = "gqk,gkd->gqd"}> : () -> ()
    %cst_49 = arith.constant dense<0.000000e+00> : vector<4x8x16xf32>
    %167 = tpu.matmul %166, %149, %cst_49 {dimension_numbers = #tpu.dot_dimension_numbers<[2], [1], [1], [2], [0, 0, 0, 1, 1, 2], [0], [0]>} : vector<4x8x8xf32>, vector<4x8x16xf32>, vector<4x8x16xf32> -> vector<4x8x16xf32>
    "tpu.trace_stop"() : () -> ()
    %168 = vector.extract_strided_slice %167 {offsets = [0, 0, 0], sizes = [2, 8, 16], strides = [1, 1, 1]} : vector<4x8x16xf32> to vector<2x8x16xf32>
    %169 = vector.extract_strided_slice %167 {offsets = [2, 0, 0], sizes = [2, 8, 16], strides = [1, 1, 1]} : vector<4x8x16xf32> to vector<2x8x16xf32>
    %170 = tpu.concatenate %168, %169 in 2 : vector<2x8x16xf32>, vector<2x8x16xf32> -> vector<2x8x32xf32>
    %171 = vector.shape_cast %170 : vector<2x8x32xf32> to vector<16x32xf32>
    %cst_50 = arith.constant dense<0.000000e+00> : vector<16x32xf32>
    %172 = tpu.matmul %171, %130, %cst_50 {dimension_numbers = #tpu.dot_dimension_numbers<[1], [0], [0], [1], [0, 0, 1, 1], [], []>} : vector<16x32xf32>, vector<32x32xf32>, vector<16x32xf32> -> vector<16x32xf32>
    %173 = vector.broadcast %133 : vector<1x32xf32> to vector<16x32xf32>
    %174 = arith.addf %172, %173 : vector<16x32xf32>
    %175 = arith.addf %174, %121 : vector<16x32xf32>
    %cst_51 = arith.constant dense<0.000000e+00> : vector<16xf32>
    %176 = vector.multi_reduction <add>, %175, %cst_51 [1] : vector<16x32xf32> to vector<16xf32>
    %177 = vector.shape_cast %176 : vector<16xf32> to vector<16x1xf32>
    %cst_52 = arith.constant 3.200000e+01 : f32
    %178 = vector.broadcast %cst_52 : f32 to vector<16x1xf32>
    %179 = arith.divf %177, %178 : vector<16x1xf32>
    %180 = arith.mulf %175, %175 : vector<16x32xf32>
    %cst_53 = arith.constant dense<0.000000e+00> : vector<16xf32>
    %181 = vector.multi_reduction <add>, %180, %cst_53 [1] : vector<16x32xf32> to vector<16xf32>
    %182 = vector.shape_cast %181 : vector<16xf32> to vector<16x1xf32>
    %cst_54 = arith.constant 3.200000e+01 : f32
    %183 = vector.broadcast %cst_54 : f32 to vector<16x1xf32>
    %184 = arith.divf %182, %183 : vector<16x1xf32>
    %185 = arith.mulf %179, %179 : vector<16x1xf32>
    %186 = arith.subf %184, %185 : vector<16x1xf32>
    %187 = vector.broadcast %179 : vector<16x1xf32> to vector<16x32xf32>
    %188 = arith.subf %175, %187 : vector<16x32xf32>
    %cst_55 = arith.constant 9.99999974E-6 : f32
    %189 = vector.broadcast %cst_55 : f32 to vector<16x1xf32>
    %190 = arith.addf %186, %189 : vector<16x1xf32>
    %191 = math.rsqrt %190 : vector<16x1xf32>
    %192 = vector.broadcast %191 : vector<16x1xf32> to vector<16x32xf32>
    %193 = arith.mulf %188, %192 : vector<16x32xf32>
    %194 = vector.broadcast %134 : vector<1x32xf32> to vector<16x32xf32>
    %195 = arith.mulf %193, %194 : vector<16x32xf32>
    %196 = vector.broadcast %135 : vector<1x32xf32> to vector<16x32xf32>
    %197 = arith.addf %195, %196 : vector<16x32xf32>
    %cst_56 = arith.constant dense<0.000000e+00> : vector<16x64xf32>
    %198 = tpu.matmul %197, %129, %cst_56 {dimension_numbers = #tpu.dot_dimension_numbers<[1], [0], [0], [1], [0, 0, 1, 1], [], []>} : vector<16x32xf32>, vector<32x64xf32>, vector<16x64xf32> -> vector<16x64xf32>
    %199 = vector.broadcast %136 : vector<1x64xf32> to vector<16x64xf32>
    %200 = arith.addf %198, %199 : vector<16x64xf32>
    %cst_57 = arith.constant 0.000000e+00 : f32
    %201 = vector.broadcast %cst_57 : f32 to vector<16x64xf32>
    %202 = arith.maximumf %200, %201 : vector<16x64xf32>
    %cst_58 = arith.constant dense<0.000000e+00> : vector<16x32xf32>
    %203 = tpu.matmul %202, %131, %cst_58 {dimension_numbers = #tpu.dot_dimension_numbers<[1], [0], [0], [1], [0, 0, 1, 1], [], []>} : vector<16x64xf32>, vector<64x32xf32>, vector<16x32xf32> -> vector<16x32xf32>
    %204 = vector.broadcast %137 : vector<1x32xf32> to vector<16x32xf32>
    %205 = arith.addf %203, %204 : vector<16x32xf32>
    %206 = arith.addf %205, %197 : vector<16x32xf32>
    %cst_59 = arith.constant dense<0.000000e+00> : vector<16xf32>
    %207 = vector.multi_reduction <add>, %206, %cst_59 [1] : vector<16x32xf32> to vector<16xf32>
    %208 = vector.shape_cast %207 : vector<16xf32> to vector<16x1xf32>
    %cst_60 = arith.constant 3.200000e+01 : f32
    %209 = vector.broadcast %cst_60 : f32 to vector<16x1xf32>
    %210 = arith.divf %208, %209 : vector<16x1xf32>
    %211 = arith.mulf %206, %206 : vector<16x32xf32>
    %cst_61 = arith.constant dense<0.000000e+00> : vector<16xf32>
    %212 = vector.multi_reduction <add>, %211, %cst_61 [1] : vector<16x32xf32> to vector<16xf32>
    %213 = vector.shape_cast %212 : vector<16xf32> to vector<16x1xf32>
    %cst_62 = arith.constant 3.200000e+01 : f32
    %214 = vector.broadcast %cst_62 : f32 to vector<16x1xf32>
    %215 = arith.divf %213, %214 : vector<16x1xf32>
    %216 = arith.mulf %210, %210 : vector<16x1xf32>
    %217 = arith.subf %215, %216 : vector<16x1xf32>
    %218 = vector.broadcast %210 : vector<16x1xf32> to vector<16x32xf32>
    %219 = arith.subf %206, %218 : vector<16x32xf32>
    %cst_63 = arith.constant 9.99999974E-6 : f32
    %220 = vector.broadcast %cst_63 : f32 to vector<16x1xf32>
    %221 = arith.addf %217, %220 : vector<16x1xf32>
    %222 = math.rsqrt %221 : vector<16x1xf32>
    %223 = vector.broadcast %222 : vector<16x1xf32> to vector<16x32xf32>
    %224 = arith.mulf %219, %223 : vector<16x32xf32>
    %225 = vector.broadcast %138 : vector<1x32xf32> to vector<16x32xf32>
    %226 = arith.mulf %224, %225 : vector<16x32xf32>
    %227 = vector.broadcast %139 : vector<1x32xf32> to vector<16x32xf32>
    %228 = arith.addf %226, %227 : vector<16x32xf32>
    %229 = vector.shape_cast %228 : vector<16x32xf32> to vector<2x8x32xf32>
    %c0_64 = arith.constant 0 : index
    %c0_65 = arith.constant 0 : index
    %c0_66 = arith.constant 0 : index
    %230 = vector.load %arg6[%c0_64, %c0_65, %c0_66] : memref<2x8x32xf32, #tpu.memory_space<vmem>>, vector<2x8x32xf32>
    tpu.vector_store %arg6[%c0_64, %c0_65, %c0_66], %229 {strides = array<i32>} : memref<2x8x32xf32, #tpu.memory_space<vmem>>, vector<2x8x32xf32>,
    return
  }
}

</mosaic_0001>

<llo_original>
// kernel: encoder_forward.1
$region0: #{encoder_forward.1}
  #allocation0 [shape = 'u32[]', space=smem, size = 0x4, offset = 0x4, fixed_abs, tag = 'smem constant byte address 0x4 - core index']
  #allocation1 [shape = 'u32[144,128]{1,0:T(1,128)}', space=vmem, size = 0x12000, scoped, tag = 'internal scratch']
  %s0 = inlined_call_operand.vmem [shape: f32[2,8,32], index: 0, kind: input, shape index: {}]
  %s1 = inlined_call_operand.vmem [shape: f32[8,32], index: 1, kind: input, shape index: {}]
  %s2 = inlined_call_operand.vmem [shape: f32[2,1,8], index: 2, kind: input, shape index: {}]
  %s3 = inlined_call_operand.vmem [shape: f32[2,32,192], index: 3, kind: input, shape index: {}]
  %s4 = inlined_call_operand.vmem [shape: f32[2,96,32], index: 4, kind: input, shape index: {}]
  %s5 = inlined_call_operand.vmem [shape: f32[2,8,128], index: 5, kind: input, shape index: {}]
  %s6 = inlined_call_operand.hbm [shape: f32[2,8,32], index: 6, kind: output, shape index: {}]
  %s7 = sld [smem:[#allocation0]]
  $region34: #{encoder_forward.1} parent=0
    _
  %s9 = ssub.s32 1, %s7
  %s10 = scalar_select 0, %s9, %s7
  $region1: #{encoder_forward.1} parent=0
    #allocation2 [shape = 'u8[8192]{0}', space=vmem, size = 0x2000, scoped, tag = 'output window, operand 0, single buffered']
    #allocation3 [shape = 's32[1]{0}', space=sflag, size = 0x4, scoped, tag = 'scoped memory for encoder_forward.1']
    %11 = vsyncpa [#allocation3], 0
    // Predicated region
    $region2: #{encoder_forward.1} parent=1 // pred_check
      _
    $region3: #{encoder_forward.1} parent=1 // pred_check_branch
      %13 = sbr.rel (0) target = $region5
    $region4: #{encoder_forward.1} parent=1 // pred_region
      _
    $region5: #{encoder_forward.1} parent=1 // pred_fallthru
      _
    // Predicated region
    $region6: #{encoder_forward.1} parent=1 // pred_check
      _
    $region7: #{encoder_forward.1} parent=1 // pred_check_branch
      %15 = sbr.rel (0) target = $region9
    $region8: #{encoder_forward.1} parent=1 // pred_region
      _
    $region9: #{encoder_forward.1} parent=1 // pred_fallthru
      _
    // Predicated region
    $region10: #{encoder_forward.1} parent=1 // pred_check
      _
    $region11: #{encoder_forward.1} parent=1 // pred_check_branch
      %17 = sbr.rel (0) target = $region13
    $region12: #{encoder_forward.1} parent=1 // pred_region
      _
    $region13: #{encoder_forward.1} parent=1 // pred_fallthru
      _
    // Predicated region
    $region14: #{encoder_forward.1} parent=1 // pred_check
      _
    $region15: #{encoder_forward.1} parent=1 // pred_check_branch
      %19 = sbr.rel (0) target = $region17
    $region16: #{encoder_forward.1} parent=1 // pred_region
      _
    $region17: #{encoder_forward.1} parent=1 // pred_fallthru
      _
    // Predicated region
    $region18: #{encoder_forward.1} parent=1 // pred_check
      _
    $region19: #{encoder_forward.1} parent=1 // pred_check_branch
      %21 = sbr.rel (0) target = $region21
    $region20: #{encoder_forward.1} parent=1 // pred_region
      _
    $region21: #{encoder_forward.1} parent=1 // pred_fallthru
      _
    // Predicated region
    $region22: #{encoder_forward.1} parent=1 // pred_check
      _
    $region23: #{encoder_forward.1} parent=1 // pred_check_branch
      %23 = sbr.rel (0) target = $region25
    $region24: #{encoder_forward.1} parent=1 // pred_region
      _
    $region25: #{encoder_forward.1} parent=1 // pred_fallthru
      _
    %v24 = vld [vmem:[%s0] sm:$0xff]
    %v25 = vld [vmem:[%s0 + $0x8] sm:$0xff]
    %v26 = vld [vmem:[%s1] sm:$0xff]
    %v27 = vadd.f32 %v24, %v26
    %v28 = vadd.f32 %v25, %v26
    %v29 = vld [vmem:[%s2] sm:$0x1]
    %v30 = vld [vmem:[%s2 + $0x1] sm:$0x1]
    %vm31 = vcmp.gt.f32.partialorder %v29, 0.0
    %vm32 = vcmp.gt.f32.partialorder %v30, 0.0
    %v33 = vsel %vm31, 0.0, -1e+09
    %v34 = vsel %vm32, 0.0, -1e+09
    %v37 = vlaneseq
    %v38 = vshrl.u32 %v37, 7
    %v39 = vsub.s32 0, %v38
    %v40 = vrot.slane %v33, %v39
    %v41 = vlaneseq
    %v42 = vshrl.u32 %v41, 7
    %v43 = vsub.s32 0, %v42
    %v44 = vrot.slane %v34, %v43
    %v47 = vld [vmem:[%s3] sm:$0xff]
    %v48 = vld [vmem:[%s3 + $0x8] sm:$0xff]
    %v49 = vld [vmem:[%s3 + $0x10] sm:$0xff]
    %v50 = vld [vmem:[%s3 + $0x18] sm:$0xff]
    %v51 = vld [vmem:[%s3 + $0x20] sm:$0xff]
    %v52 = vld [vmem:[%s3 + $0x28] sm:$0xff]
    %v53 = vld [vmem:[%s3 + $0x30] sm:$0xff]
    %v54 = vld [vmem:[%s3 + $0x38] sm:$0xff]
    %v55 = vld [vmem:[%s4] sm:$0xff]
    %v56 = vld [vmem:[%s4 + $0x8] sm:$0xff]
    %v57 = vld [vmem:[%s4 + $0x10] sm:$0xff]
    %v58 = vld [vmem:[%s4 + $0x18] sm:$0xff]
    %v59 = vld [vmem:[%s4 + $0x20] sm:$0xff]
    %v60 = vld [vmem:[%s4 + $0x28] sm:$0xff]
    %v61 = vld [vmem:[%s4 + $0x30] sm:$0xff]
    %v62 = vld [vmem:[%s4 + $0x38] sm:$0xff]
    %v63 = vld [vmem:[%s4 + $0x40] sm:$0xff]
    %v64 = vld [vmem:[%s4 + $0x48] sm:$0xff]
    %v65 = vld [vmem:[%s4 + $0x50] sm:$0xff]
    %v66 = vld [vmem:[%s4 + $0x58] sm:$0xff]
    %v67 = vld [vmem:[%s5] sm:$0xff]
    %v68 = vlaneseq
    %v69 = vshrl.u32 %v68, 7
    %v70 = vsub.s32 0, %v69
    %v71 = vrot.slane %v67, %v70
    %vm72 = vcmask 261120
    %v74 = vsel %vm72, %v27, 0
    %v77 = vsel %vm72, %v28, 0
    %79 = vmatprep.subr.mxu0 0.0
    %80 = vmatpush1.msra.mxu0 %v47
    %81 = vmatprep.subr.mxu0 0.0
    %82 = vmatpush1.msra.mxu0 %v49
    %83 = vmatprep.subr.mxu0 0.0
    %84 = vmatpush1.msra.mxu0 %v51
    %85 = vmatprep.subr.mxu0 0.0
    %86 = vmatpush1.msra.mxu0 %v53
    %87 = vmatprep.subr.mxu0 0.0
    %88 = vmatpush1.msra.mxu0 0.0
    %89 = vmatprep.subr.mxu0 0.0
    %90 = vmatpush1.msra.mxu0 0.0
    %91 = vmatprep.subr.mxu0 0.0
    %92 = vmatpush1.msra.mxu0 0.0
    %93 = vmatprep.subr.mxu0 0.0
    %94 = vmatpush1.msra.mxu0 0.0
    %95 = vmatprep.subr.mxu0 0.0
    %96 = vmatpush1.msra.mxu0 0.0
    %97 = vmatprep.subr.mxu0 0.0
    %98 = vmatpush1.msra.mxu0 0.0
    %99 = vmatprep.subr.mxu0 0.0
    %100 = vmatpush1.msra.mxu0 0.0
    %101 = vmatprep.subr.mxu0 0.0
    %102 = vmatpush1.msra.mxu0 0.0
    %103 = vmatprep.subr.mxu0 0.0
    %104 = vmatpush1.msra.mxu0 0.0
    %105 = vmatprep.subr.mxu0 0.0
    %106 = vmatpush1.msra.mxu0 0.0
    %107 = vmatprep.subr.mxu0 0.0
    %108 = vmatpush1.msra.mxu0 0.0
    %109 = vmatprep.subr.mxu0 0.0
    %110 = vmatpush1.msra.mxu0 0.0
    %111 = vmatprep.subr.mxu0 0.0
    %112 = vmatpush1.msra.mxu0 0.0
    %113 = vmatprep.subr.mxu0 0.0
    %114 = vmatpush1.msra.mxu0 0.0
    %115 = vmatprep.subr.mxu0 0.0
    %116 = vmatpush1.msra.mxu0 0.0
    %117 = vmatprep.subr.mxu0 0.0
    %118 = vmatpush1.msra.mxu0 0.0
    %119 = vmatprep.subr.mxu0 0.0
    %120 = vmatpush1.msra.mxu0 0.0
    %121 = vmatprep.subr.mxu0 0.0
    %122 = vmatpush1.msra.mxu0 0.0
    %123 = vmatprep.subr.mxu0 0.0
    %124 = vmatpush1.msra.mxu0 0.0
    %125 = vmatprep.subr.mxu0 0.0
    %126 = vmatpush1.msra.mxu0 0.0
    %127 = vmatprep.subr.mxu0 0.0
    %128 = vmatpush1.msra.mxu0 0.0
    %129 = vmatprep.subr.mxu0 0.0
    %130 = vmatpush1.msra.mxu0 0.0
    %131 = vmatprep.subr.mxu0 0.0
    %132 = vmatpush1.msra.mxu0 0.0
    %133 = vmatprep.subr.mxu0 0.0
    %134 = vmatpush1.msra.mxu0 0.0
    %135 = vmatprep.subr.mxu0 0.0
    %136 = vmatpush1.msra.mxu0 0.0
    %137 = vmatprep.subr.mxu0 0.0
    %138 = vmatpush1.msra.mxu0 0.0
    %139 = vmatprep.subr.mxu0 0.0
    %140 = vmatpush1.msra.mxu0 0.0
    %141 = vmatprep.subr.mxu0 0.0
    %142 = vmatpush1.msra.mxu0 0.0
    %143 = vmatprep.mubr.f32.mxu0 0.0
    %144 = vmatmul.mubr.f32.gmra.mrb[0].mxu0 %v74
    %v145 = vpop.f32.mrb[0].mxu0
    %v146 = vadd.f32 %v71, %v145
    %v147 = vpop.f32.mrb[0].mxu0
    %148 = vmatprep.mubr.f32.mxu0 0.0
    %149 = vmatmul.mubr.f32.gmra.mrb[0].mxu0 %v77
    %v150 = vpop.f32.mrb[0].mxu0
    %v151 = vadd.f32 %v71, %v150
    %v152 = vpop.f32.mrb[0].mxu0
    %153 = vdwg.mxu0
    %156 = vrot.lane.b32.xlu0 %v146, 112
    %v157 = vpop.permute.xlu0 %156
    %158 = vrot.lane.b32.xlu0 %v151, 112
    %v159 = vpop.permute.xlu0 %158
    %160 = vrot.lane.b32.xlu0 %v146, 96
    %v161 = vpop.permute.xlu0 %160
    %162 = vrot.lane.b32.xlu0 %v151, 96
    %v163 = vpop.permute.xlu0 %162
    %166 = vxpose.xlu0.b32.start [1/16] %v161, 128
    %167 = vxpose.xlu0.b32.cont [2/16] 0.0, 128
    %168 = vxpose.xlu0.b32.cont [3/16] 0.0, 128
    %169 = vxpose.xlu0.b32.cont [4/16] 0.0, 128
    %170 = vxpose.xlu0.b32.cont [5/16] 0.0, 128
    %171 = vxpose.xlu0.b32.cont [6/16] 0.0, 128
    %172 = vxpose.xlu0.b32.cont [7/16] 0.0, 128
    %173 = vxpose.xlu0.b32.cont [8/16] 0.0, 128
    %174 = vxpose.xlu0.b32.cont [9/16] 0.0, 128
    %175 = vxpose.xlu0.b32.cont [10/16] 0.0, 128
    %176 = vxpose.xlu0.b32.cont [11/16] 0.0, 128
    %177 = vxpose.xlu0.b32.cont [12/16] 0.0, 128
    %178 = vxpose.xlu0.b32.cont [13/16] 0.0, 128
    %179 = vxpose.xlu0.b32.cont [14/16] 0.0, 128
    %180 = vxpose.xlu0.b32.cont [15/16] 0.0, 128
    %181 = vxpose.xlu0.b32.end [16/16] 0.0, 128
    %v182 = vpop.trf.xlu0
    %v183 = vpop.trf.xlu0
    %v184 = vpop.trf.xlu0
    %v185 = vpop.trf.xlu0
    %v186 = vpop.trf.xlu0
    %v187 = vpop.trf.xlu0
    %v188 = vpop.trf.xlu0
    %v189 = vpop.trf.xlu0
    %v190 = vpop.trf.xlu0
    %v191 = vpop.trf.xlu0
    %v192 = vpop.trf.xlu0
    %v193 = vpop.trf.xlu0
    %v194 = vpop.trf.xlu0
    %v195 = vpop.trf.xlu0
    %v196 = vpop.trf.xlu0
    %v197 = vpop.trf.xlu0
    %198 = vxpose.xlu0.b32.start [1/16] %v163, 128
    %199 = vxpose.xlu0.b32.cont [2/16] 0.0, 128
    %200 = vxpose.xlu0.b32.cont [3/16] 0.0, 128
    %201 = vxpose.xlu0.b32.cont [4/16] 0.0, 128
    %202 = vxpose.xlu0.b32.cont [5/16] 0.0, 128
    %203 = vxpose.xlu0.b32.cont [6/16] 0.0, 128
    %204 = vxpose.xlu0.b32.cont [7/16] 0.0, 128
    %205 = vxpose.xlu0.b32.cont [8/16] 0.0, 128
    %206 = vxpose.xlu0.b32.cont [9/16] 0.0, 128
    %207 = vxpose.xlu0.b32.cont [10/16] 0.0, 128
    %208 = vxpose.xlu0.b32.cont [11/16] 0.0, 128
    %209 = vxpose.xlu0.b32.cont [12/16] 0.0, 128
    %210 = vxpose.xlu0.b32.cont [13/16] 0.0, 128
    %211 = vxpose.xlu0.b32.cont [14/16] 0.0, 128
    %212 = vxpose.xlu0.b32.cont [15/16] 0.0, 128
    %213 = vxpose.xlu0.b32.end [16/16] 0.0, 128
    %v214 = vpop.trf.xlu0
    %v215 = vpop.trf.xlu0
    %v216 = vpop.trf.xlu0
    %v217 = vpop.trf.xlu0
    %v218 = vpop.trf.xlu0
    %v219 = vpop.trf.xlu0
    %v220 = vpop.trf.xlu0
    %v221 = vpop.trf.xlu0
    %v222 = vpop.trf.xlu0
    %v223 = vpop.trf.xlu0
    %v224 = vpop.trf.xlu0
    %v225 = vpop.trf.xlu0
    %v226 = vpop.trf.xlu0
    %v227 = vpop.trf.xlu0
    %v228 = vpop.trf.xlu0
    %v229 = vpop.trf.xlu0
    %vm230 = vcmask 130048
    %v231 = vsel %vm230, %v146, 0
    %233 = vmatprep.subr.mxu0 0.0
    %234 = vmatpush1.msra.mxu0 %v182
    %235 = vmatprep.subr.mxu0 0.0
    %236 = vmatpush1.msra.mxu0 %v183
    %237 = vmatprep.subr.mxu0 0.0
    %238 = vmatpush1.msra.mxu0 0.0
    %239 = vmatprep.subr.mxu0 0.0
    %240 = vmatpush1.msra.mxu0 0.0
    %241 = vmatprep.subr.mxu0 0.0
    %242 = vmatpush1.msra.mxu0 0.0
    %243 = vmatprep.subr.mxu0 0.0
    %244 = vmatpush1.msra.mxu0 0.0
    %245 = vmatprep.subr.mxu0 0.0
    %246 = vmatpush1.msra.mxu0 0.0
    %247 = vmatprep.subr.mxu0 0.0
    %248 = vmatpush1.msra.mxu0 0.0
    %249 = vmatprep.subr.mxu0 0.0
    %250 = vmatpush1.msra.mxu0 0.0
    %251 = vmatprep.subr.mxu0 0.0
    %252 = vmatpush1.msra.mxu0 0.0
    %253 = vmatprep.subr.mxu0 0.0
    %254 = vmatpush1.msra.mxu0 0.0
    %255 = vmatprep.subr.mxu0 0.0
    %256 = vmatpush1.msra.mxu0 0.0
    %257 = vmatprep.subr.mxu0 0.0
    %258 = vmatpush1.msra.mxu0 0.0
    %259 = vmatprep.subr.mxu0 0.0
    %260 = vmatpush1.msra.mxu0 0.0
    %261 = vmatprep.subr.mxu0 0.0
    %262 = vmatpush1.msra.mxu0 0.0
    %263 = vmatprep.subr.mxu0 0.0
    %264 = vmatpush1.msra.mxu0 0.0
    %265 = vmatprep.subr.mxu0 0.0
    %266 = vmatpush1.msra.mxu0 0.0
    %267 = vmatprep.subr.mxu0 0.0
    %268 = vmatpush1.msra.mxu0 0.0
    %269 = vmatprep.subr.mxu0 0.0
    %270 = vmatpush1.msra.mxu0 0.0
    %271 = vmatprep.subr.mxu0 0.0
    %272 = vmatpush1.msra.mxu0 0.0
    %273 = vmatprep.subr.mxu0 0.0
    %274 = vmatpush1.msra.mxu0 0.0
    %275 = vmatprep.subr.mxu0 0.0
    %276 = vmatpush1.msra.mxu0 0.0
    %277 = vmatprep.subr.mxu0 0.0
    %278 = vmatpush1.msra.mxu0 0.0
    %279 = vmatprep.subr.mxu0 0.0
    %280 = vmatpush1.msra.mxu0 0.0
    %281 = vmatprep.subr.mxu0 0.0
    %282 = vmatpush1.msra.mxu0 0.0
    %283 = vmatprep.subr.mxu0 0.0
    %284 = vmatpush1.msra.mxu0 0.0
    %285 = vmatprep.subr.mxu0 0.0
    %286 = vmatpush1.msra.mxu0 0.0
    %287 = vmatprep.subr.mxu0 0.0
    %288 = vmatpush1.msra.mxu0 0.0
    %289 = vmatprep.subr.mxu0 0.0
    %290 = vmatpush1.msra.mxu0 0.0
    %291 = vmatprep.subr.mxu0 0.0
    %292 = vmatpush1.msra.mxu0 0.0
    %293 = vmatprep.subr.mxu0 0.0
    %294 = vmatpush1.msra.mxu0 0.0
    %295 = vmatprep.subr.mxu0 0.0
    %296 = vmatpush1.msra.mxu0 0.0
    %297 = vmatprep.mubr.f32.mxu0 0.0
    %298 = vmatmul.mubr.f32.gmra.mrb[0].mxu0 %v231
    %v299 = vpop.f32.mrb[0].mxu0
    %v300 = vadd.f32 %v40, %v299
    %v301 = vpop.f32.mrb[0].mxu0
    %302 = vdwg.mxu0
    %v303 = vsel %vm230, %v151, 0
    %305 = vmatprep.subr.mxu0 0.0
    %306 = vmatpush1.msra.mxu0 %v214
    %307 = vmatprep.subr.mxu0 0.0
    %308 = vmatpush1.msra.mxu0 %v215
    %309 = vmatprep.subr.mxu0 0.0
    %310 = vmatpush1.msra.mxu0 0.0
    %311 = vmatprep.subr.mxu0 0.0
    %312 = vmatpush1.msra.mxu0 0.0
    %313 = vmatprep.subr.mxu0 0.0
    %314 = vmatpush1.msra.mxu0 0.0
    %315 = vmatprep.subr.mxu0 0.0
    %316 = vmatpush1.msra.mxu0 0.0
    %317 = vmatprep.subr.mxu0 0.0
    %318 = vmatpush1.msra.mxu0 0.0
    %319 = vmatprep.subr.mxu0 0.0
    %320 = vmatpush1.msra.mxu0 0.0
    %321 = vmatprep.subr.mxu0 0.0
    %322 = vmatpush1.msra.mxu0 0.0
    %323 = vmatprep.subr.mxu0 0.0
    %324 = vmatpush1.msra.mxu0 0.0
    %325 = vmatprep.subr.mxu0 0.0
    %326 = vmatpush1.msra.mxu0 0.0
    %327 = vmatprep.subr.mxu0 0.0
    %328 = vmatpush1.msra.mxu0 0.0
    %329 = vmatprep.subr.mxu0 0.0
    %330 = vmatpush1.msra.mxu0 0.0
    %331 = vmatprep.subr.mxu0 0.0
    %332 = vmatpush1.msra.mxu0 0.0
    %333 = vmatprep.subr.mxu0 0.0
    %334 = vmatpush1.msra.mxu0 0.0
    %335 = vmatprep.subr.mxu0 0.0
    %336 = vmatpush1.msra.mxu0 0.0
    %337 = vmatprep.subr.mxu0 0.0
    %338 = vmatpush1.msra.mxu0 0.0
    %339 = vmatprep.subr.mxu0 0.0
    %340 = vmatpush1.msra.mxu0 0.0
    %341 = vmatprep.subr.mxu0 0.0
    %342 = vmatpush1.msra.mxu0 0.0
    %343 = vmatprep.subr.mxu0 0.0
    %344 = vmatpush1.msra.mxu0 0.0
    %345 = vmatprep.subr.mxu0 0.0
    %346 = vmatpush1.msra.mxu0 0.0
    %347 = vmatprep.subr.mxu0 0.0
    %348 = vmatpush1.msra.mxu0 0.0
    %349 = vmatprep.subr.mxu0 0.0
    %350 = vmatpush1.msra.mxu0 0.0
    %351 = vmatprep.subr.mxu0 0.0
    %352 = vmatpush1.msra.mxu0 0.0
    %353 = vmatprep.subr.mxu0 0.0
    %354 = vmatpush1.msra.mxu0 0.0
    %355 = vmatprep.subr.mxu0 0.0
    %356 = vmatpush1.msra.mxu0 0.0
    %357 = vmatprep.subr.mxu0 0.0
    %358 = vmatpush1.msra.mxu0 0.0
    %359 = vmatprep.subr.mxu0 0.0
    %360 = vmatpush1.msra.mxu0 0.0
    %361 = vmatprep.subr.mxu0 0.0
    %362 = vmatpush1.msra.mxu0 0.0
    %363 = vmatprep.subr.mxu0 0.0
    %364 = vmatpush1.msra.mxu0 0.0
    %365 = vmatprep.subr.mxu0 0.0
    %366 = vmatpush1.msra.mxu0 0.0
    %367 = vmatprep.subr.mxu0 0.0
    %368 = vmatpush1.msra.mxu0 0.0
    %369 = vmatprep.mubr.f32.mxu0 0.0
    %370 = vmatmul.mubr.f32.gmra.mrb[0].mxu0 %v303
    %v371 = vpop.f32.mrb[0].mxu0
    %v372 = vadd.f32 %v44, %v371
    %v373 = vpop.f32.mrb[0].mxu0
    %374 = vdwg.mxu0
    %v375 = vsel %vm230, %v157, 0
    %377 = vmatprep.subr.mxu0 0.0
    %378 = vmatpush1.msra.mxu0 %v184
    %379 = vmatprep.subr.mxu0 0.0
    %380 = vmatpush1.msra.mxu0 %v185
    %381 = vmatprep.subr.mxu0 0.0
    %382 = vmatpush1.msra.mxu0 0.0
    %383 = vmatprep.subr.mxu0 0.0
    %384 = vmatpush1.msra.mxu0 0.0
    %385 = vmatprep.subr.mxu0 0.0
    %386 = vmatpush1.msra.mxu0 0.0
    %387 = vmatprep.subr.mxu0 0.0
    %388 = vmatpush1.msra.mxu0 0.0
    %389 = vmatprep.subr.mxu0 0.0
    %390 = vmatpush1.msra.mxu0 0.0
    %391 = vmatprep.subr.mxu0 0.0
    %392 = vmatpush1.msra.mxu0 0.0
    %393 = vmatprep.subr.mxu0 0.0
    %394 = vmatpush1.msra.mxu0 0.0
    %395 = vmatprep.subr.mxu0 0.0
    %396 = vmatpush1.msra.mxu0 0.0
    %397 = vmatprep.subr.mxu0 0.0
    %398 = vmatpush1.msra.mxu0 0.0
    %399 = vmatprep.subr.mxu0 0.0
    %400 = vmatpush1.msra.mxu0 0.0
    %401 = vmatprep.subr.mxu0 0.0
    %402 = vmatpush1.msra.mxu0 0.0
    %403 = vmatprep.subr.mxu0 0.0
    %404 = vmatpush1.msra.mxu0 0.0
    %405 = vmatprep.subr.mxu0 0.0
    %406 = vmatpush1.msra.mxu0 0.0
    %407 = vmatprep.subr.mxu0 0.0
    %408 = vmatpush1.msra.mxu0 0.0
    %409 = vmatprep.subr.mxu0 0.0
    %410 = vmatpush1.msra.mxu0 0.0
    %411 = vmatprep.subr.mxu0 0.0
    %412 = vmatpush1.msra.mxu0 0.0
    %413 = vmatprep.subr.mxu0 0.0
    %414 = vmatpush1.msra.mxu0 0.0
    %415 = vmatprep.subr.mxu0 0.0
    %416 = vmatpush1.msra.mxu0 0.0
    %417 = vmatprep.subr.mxu0 0.0
    %418 = vmatpush1.msra.mxu0 0.0
    %419 = vmatprep.subr.mxu0 0.0
    %420 = vmatpush1.msra.mxu0 0.0
    %421 = vmatprep.subr.mxu0 0.0
    %422 = vmatpush1.msra.mxu0 0.0
    %423 = vmatprep.subr.mxu0 0.0
    %424 = vmatpush1.msra.mxu0 0.0
    %425 = vmatprep.subr.mxu0 0.0
    %426 = vmatpush1.msra.mxu0 0.0
    %427 = vmatprep.subr.mxu0 0.0
    %428 = vmatpush1.msra.mxu0 0.0
    %429 = vmatprep.subr.mxu0 0.0
    %430 = vmatpush1.msra.mxu0 0.0
    %431 = vmatprep.subr.mxu0 0.0
    %432 = vmatpush1.msra.mxu0 0.0
    %433 = vmatprep.subr.mxu0 0.0
    %434 = vmatpush1.msra.mxu0 0.0
    %435 = vmatprep.subr.mxu0 0.0
    %436 = vmatpush1.msra.mxu0 0.0
    %437 = vmatprep.subr.mxu0 0.0
    %438 = vmatpush1.msra.mxu0 0.0
    %439 = vmatprep.subr.mxu0 0.0
    %440 = vmatpush1.msra.mxu0 0.0
    %441 = vmatprep.mubr.f32.mxu0 0.0
    %442 = vmatmul.mubr.f32.gmra.mrb[0].mxu0 %v375
    %v443 = vpop.f32.mrb[0].mxu0
    %v444 = vadd.f32 %v40, %v443
    %v445 = vpop.f32.mrb[0].mxu0
    %446 = vdwg.mxu0
    %v447 = vsel %vm230, %v159, 0
    %449 = vmatprep.subr.mxu0 0.0
    %450 = vmatpush1.msra.mxu0 %v216
    %451 = vmatprep.subr.mxu0 0.0
    %452 = vmatpush1.msra.mxu0 %v217
    %453 = vmatprep.subr.mxu0 0.0
    %454 = vmatpush1.msra.mxu0 0.0
    %455 = vmatprep.subr.mxu0 0.0
    %456 = vmatpush1.msra.mxu0 0.0
    %457 = vmatprep.subr.mxu0 0.0
    %458 = vmatpush1.msra.mxu0 0.0
    %459 = vmatprep.subr.mxu0 0.0
    %460 = vmatpush1.msra.mxu0 0.0
    %461 = vmatprep.subr.mxu0 0.0
    %462 = vmatpush1.msra.mxu0 0.0
    %463 = vmatprep.subr.mxu0 0.0
    %464 = vmatpush1.msra.mxu0 0.0
    %465 = vmatprep.subr.mxu0 0.0
    %466 = vmatpush1.msra.mxu0 0.0
    %467 = vmatprep.subr.mxu0 0.0
    %468 = vmatpush1.msra.mxu0 0.0
    %469 = vmatprep.subr.mxu0 0.0
    %470 = vmatpush1.msra.mxu0 0.0
    %471 = vmatprep.subr.mxu0 0.0
    %472 = vmatpush1.msra.mxu0 0.0
    %473 = vmatprep.subr.mxu0 0.0
    %474 = vmatpush1.msra.mxu0 0.0
    %475 = vmatprep.subr.mxu0 0.0
    %476 = vmatpush1.msra.mxu0 0.0
    %477 = vmatprep.subr.mxu0 0.0
    %478 = vmatpush1.msra.mxu0 0.0
    %479 = vmatprep.subr.mxu0 0.0
    %480 = vmatpush1.msra.mxu0 0.0
    %481 = vmatprep.subr.mxu0 0.0
    %482 = vmatpush1.msra.mxu0 0.0
    %483 = vmatprep.subr.mxu0 0.0
    %484 = vmatpush1.msra.mxu0 0.0
    %485 = vmatprep.subr.mxu0 0.0
    %486 = vmatpush1.msra.mxu0 0.0
    %487 = vmatprep.subr.mxu0 0.0
    %488 = vmatpush1.msra.mxu0 0.0
    %489 = vmatprep.subr.mxu0 0.0
    %490 = vmatpush1.msra.mxu0 0.0
    %491 = vmatprep.subr.mxu0 0.0
    %492 = vmatpush1.msra.mxu0 0.0
    %493 = vmatprep.subr.mxu0 0.0
    %494 = vmatpush1.msra.mxu0 0.0
    %495 = vmatprep.subr.mxu0 0.0
    %496 = vmatpush1.msra.mxu0 0.0
    %497 = vmatprep.subr.mxu0 0.0
    %498 = vmatpush1.msra.mxu0 0.0
    %499 = vmatprep.subr.mxu0 0.0
    %500 = vmatpush1.msra.mxu0 0.0
    %501 = vmatprep.subr.mxu0 0.0
    %502 = vmatpush1.msra.mxu0 0.0
    %503 = vmatprep.subr.mxu0 0.0
    %504 = vmatpush1.msra.mxu0 0.0
    %505 = vmatprep.subr.mxu0 0.0
    %506 = vmatpush1.msra.mxu0 0.0
    %507 = vmatprep.subr.mxu0 0.0
    %508 = vmatpush1.msra.mxu0 0.0
    %509 = vmatprep.subr.mxu0 0.0
    %510 = vmatpush1.msra.mxu0 0.0
    %511 = vmatprep.subr.mxu0 0.0
    %512 = vmatpush1.msra.mxu0 0.0
    %513 = vmatprep.mubr.f32.mxu0 0.0
    %514 = vmatmul.mubr.f32.gmra.mrb[0].mxu0 %v447
    %v515 = vpop.f32.mrb[0].mxu0
    %v516 = vadd.f32 %v44, %v515
    %v517 = vpop.f32.mrb[0].mxu0
    %518 = vdwg.mxu0
    %vm519 = vcmask 64512
    %v520 = vsel %vm519, %v300, -inf
    %521 = vmax.xlane.f32.xlu0 %v520
    %v522 = vpop.xlane.xlu0 %521
    %v523 = vsel %vm519, %v372, -inf
    %524 = vmax.xlane.f32.xlu0 %v523
    %v525 = vpop.xlane.xlu0 %524
    %v526 = vsel %vm519, %v444, -inf
    %527 = vmax.xlane.f32.xlu0 %v526
    %v528 = vpop.xlane.xlu0 %527
    %v529 = vsel %vm519, %v516, -inf
    %530 = vmax.xlane.f32.xlu0 %v529
    %v531 = vpop.xlane.xlu0 %530
    %v532 = vsub.f32 %v300, %v522
    %v533 = vsub.f32 %v372, %v525
    %v534 = vsub.f32 %v444, %v528
    %v535 = vsub.f32 %v516, %v531
    %v536 = vmul.f32 %v532, 1.442695
    %v537 = vpow.pop %v536
    %v538 = vmul.f32 %v533, 1.442695
    %v539 = vpow.pop %v538
    %v540 = vmul.f32 %v534, 1.442695
    %v541 = vpow.pop %v540
    %v542 = vmul.f32 %v535, 1.442695
    %v543 = vpow.pop %v542
    %v544 = vsel %vm519, %v537, 0.0
    %545 = vadd.xlane.f32.xlu0 %v544
    %v546 = vpop.xlane.xlu0 %545
    %v547 = vsel %vm519, %v539, 0.0
    %548 = vadd.xlane.f32.xlu0 %v547
    %v549 = vpop.xlane.xlu0 %548
    %v550 = vsel %vm519, %v541, 0.0
    %551 = vadd.xlane.f32.xlu0 %v550
    %v552 = vpop.xlane.xlu0 %551
    %v553 = vsel %vm519, %v543, 0.0
    %554 = vadd.xlane.f32.xlu0 %v553
    %v555 = vpop.xlane.xlu0 %554
    %v556 = vrcp.pop %v546
    %v557 = vrcp.pop %v549
    %v558 = vrcp.pop %v552
    %v559 = vrcp.pop %v555
    %v560 = vmul.f32 %v537, %v556
    %v561 = vmul.f32 %v539, %v557
    %v562 = vmul.f32 %v541, %v558
    %v563 = vmul.f32 %v543, %v559
    %564 = vrot.lane.b32.xlu0 %v146, 64
    %v565 = vpop.permute.xlu0 %564
    %v568 = vsel %vm519, %v560, 0
    %570 = vmatprep.subr.mxu0 0.0
    %571 = vmatpush1.msra.mxu0 %v565
    %572 = vmatprep.subr.mxu0 0.0
    %573 = vmatpush1.msra.mxu0 0.0
    %574 = vmatprep.subr.mxu0 0.0
    %575 = vmatpush1.msra.mxu0 0.0
    %576 = vmatprep.subr.mxu0 0.0
    %577 = vmatpush1.msra.mxu0 0.0
    %578 = vmatprep.subr.mxu0 0.0
    %579 = vmatpush1.msra.mxu0 0.0
    %580 = vmatprep.subr.mxu0 0.0
    %581 = vmatpush1.msra.mxu0 0.0
    %582 = vmatprep.subr.mxu0 0.0
    %583 = vmatpush1.msra.mxu0 0.0
    %584 = vmatprep.subr.mxu0 0.0
    %585 = vmatpush1.msra.mxu0 0.0
    %586 = vmatprep.subr.mxu0 0.0
    %587 = vmatpush1.msra.mxu0 0.0
    %588 = vmatprep.subr.mxu0 0.0
    %589 = vmatpush1.msra.mxu0 0.0
    %590 = vmatprep.subr.mxu0 0.0
    %591 = vmatpush1.msra.mxu0 0.0
    %592 = vmatprep.subr.mxu0 0.0
    %593 = vmatpush1.msra.mxu0 0.0
    %594 = vmatprep.subr.mxu0 0.0
    %595 = vmatpush1.msra.mxu0 0.0
    %596 = vmatprep.subr.mxu0 0.0
    %597 = vmatpush1.msra.mxu0 0.0
    %598 = vmatprep.subr.mxu0 0.0
    %599 = vmatpush1.msra.mxu0 0.0
    %600 = vmatprep.subr.mxu0 0.0
    %601 = vmatpush1.msra.mxu0 0.0
    %602 = vmatprep.subr.mxu0 0.0
    %603 = vmatpush1.msra.mxu0 0.0
    %604 = vmatprep.subr.mxu0 0.0
    %605 = vmatpush1.msra.mxu0 0.0
    %606 = vmatprep.subr.mxu0 0.0
    %607 = vmatpush1.msra.mxu0 0.0
    %608 = vmatprep.subr.mxu0 0.0
    %609 = vmatpush1.msra.mxu0 0.0
    %610 = vmatprep.subr.mxu0 0.0
    %611 = vmatpush1.msra.mxu0 0.0
    %612 = vmatprep.subr.mxu0 0.0
    %613 = vmatpush1.msra.mxu0 0.0
    %614 = vmatprep.subr.mxu0 0.0
    %615 = vmatpush1.msra.mxu0 0.0
    %616 = vmatprep.subr.mxu0 0.0
    %617 = vmatpush1.msra.mxu0 0.0
    %618 = vmatprep.subr.mxu0 0.0
    %619 = vmatpush1.msra.mxu0 0.0
    %620 = vmatprep.subr.mxu0 0.0
    %621 = vmatpush1.msra.mxu0 0.0
    %622 = vmatprep.subr.mxu0 0.0
    %623 = vmatpush1.msra.mxu0 0.0
    %624 = vmatprep.subr.mxu0 0.0
    %625 = vmatpush1.msra.mxu0 0.0
    %626 = vmatprep.subr.mxu0 0.0
    %627 = vmatpush1.msra.mxu0 0.0
    %628 = vmatprep.subr.mxu0 0.0
    %629 = vmatpush1.msra.mxu0 0.0
    %630 = vmatprep.subr.mxu0 0.0
    %631 = vmatpush1.msra.mxu0 0.0
    %632 = vmatprep.subr.mxu0 0.0
    %633 = vmatpush1.msra.mxu0 0.0
    %634 = vmatprep.mubr.f32.mxu0 0.0
    %635 = vmatmul.mubr.f32.gmra.mrb[0].mxu0 %v568
    %v636 = vpop.f32.mrb[0].mxu0
    %v637 = vadd.f32 0.0, %v636
    %v638 = vpop.f32.mrb[0].mxu0
    %639 = vdwg.mxu0
    %640 = vrot.lane.b32.xlu0 %v151, 64
    %v641 = vpop.permute.xlu0 %640
    %v644 = vsel %vm519, %v561, 0
    %646 = vmatprep.subr.mxu0 0.0
    %647 = vmatpush1.msra.mxu0 %v641
    %648 = vmatprep.subr.mxu0 0.0
    %649 = vmatpush1.msra.mxu0 0.0
    %650 = vmatprep.subr.mxu0 0.0
    %651 = vmatpush1.msra.mxu0 0.0
    %652 = vmatprep.subr.mxu0 0.0
    %653 = vmatpush1.msra.mxu0 0.0
    %654 = vmatprep.subr.mxu0 0.0
    %655 = vmatpush1.msra.mxu0 0.0
    %656 = vmatprep.subr.mxu0 0.0
    %657 = vmatpush1.msra.mxu0 0.0
    %658 = vmatprep.subr.mxu0 0.0
    %659 = vmatpush1.msra.mxu0 0.0
    %660 = vmatprep.subr.mxu0 0.0
    %661 = vmatpush1.msra.mxu0 0.0
    %662 = vmatprep.subr.mxu0 0.0
    %663 = vmatpush1.msra.mxu0 0.0
    %664 = vmatprep.subr.mxu0 0.0
    %665 = vmatpush1.msra.mxu0 0.0
    %666 = vmatprep.subr.mxu0 0.0
    %667 = vmatpush1.msra.mxu0 0.0
    %668 = vmatprep.subr.mxu0 0.0
    %669 = vmatpush1.msra.mxu0 0.0
    %670 = vmatprep.subr.mxu0 0.0
    %671 = vmatpush1.msra.mxu0 0.0
    %672 = vmatprep.subr.mxu0 0.0
    %673 = vmatpush1.msra.mxu0 0.0
    %674 = vmatprep.subr.mxu0 0.0
    %675 = vmatpush1.msra.mxu0 0.0
    %676 = vmatprep.subr.mxu0 0.0
    %677 = vmatpush1.msra.mxu0 0.0
    %678 = vmatprep.subr.mxu0 0.0
    %679 = vmatpush1.msra.mxu0 0.0
    %680 = vmatprep.subr.mxu0 0.0
    %681 = vmatpush1.msra.mxu0 0.0
    %682 = vmatprep.subr.mxu0 0.0
    %683 = vmatpush1.msra.mxu0 0.0
    %684 = vmatprep.subr.mxu0 0.0
    %685 = vmatpush1.msra.mxu0 0.0
    %686 = vmatprep.subr.mxu0 0.0
    %687 = vmatpush1.msra.mxu0 0.0
    %688 = vmatprep.subr.mxu0 0.0
    %689 = vmatpush1.msra.mxu0 0.0
    %690 = vmatprep.subr.mxu0 0.0
    %691 = vmatpush1.msra.mxu0 0.0
    %692 = vmatprep.subr.mxu0 0.0
    %693 = vmatpush1.msra.mxu0 0.0
    %694 = vmatprep.subr.mxu0 0.0
    %695 = vmatpush1.msra.mxu0 0.0
    %696 = vmatprep.subr.mxu0 0.0
    %697 = vmatpush1.msra.mxu0 0.0
    %698 = vmatprep.subr.mxu0 0.0
    %699 = vmatpush1.msra.mxu0 0.0
    %700 = vmatprep.subr.mxu0 0.0
    %701 = vmatpush1.msra.mxu0 0.0
    %702 = vmatprep.subr.mxu0 0.0
    %703 = vmatpush1.msra.mxu0 0.0
    %704 = vmatprep.subr.mxu0 0.0
    %705 = vmatpush1.msra.mxu0 0.0
    %706 = vmatprep.subr.mxu0 0.0
    %707 = vmatpush1.msra.mxu0 0.0
    %708 = vmatprep.subr.mxu0 0.0
    %709 = vmatpush1.msra.mxu0 0.0
    %710 = vmatprep.mubr.f32.mxu0 0.0
    %711 = vmatmul.mubr.f32.gmra.mrb[0].mxu0 %v644
    %v712 = vpop.f32.mrb[0].mxu0
    %v713 = vadd.f32 0.0, %v712
    %v714 = vpop.f32.mrb[0].mxu0
    %715 = vdwg.mxu0
    %716 = vrot.lane.b32.xlu0 %v157, 64
    %v717 = vpop.permute.xlu0 %716
    %v720 = vsel %vm519, %v562, 0
    %722 = vmatprep.subr.mxu0 0.0
    %723 = vmatpush1.msra.mxu0 %v717
    %724 = vmatprep.subr.mxu0 0.0
    %725 = vmatpush1.msra.mxu0 0.0
    %726 = vmatprep.subr.mxu0 0.0
    %727 = vmatpush1.msra.mxu0 0.0
    %728 = vmatprep.subr.mxu0 0.0
    %729 = vmatpush1.msra.mxu0 0.0
    %730 = vmatprep.subr.mxu0 0.0
    %731 = vmatpush1.msra.mxu0 0.0
    %732 = vmatprep.subr.mxu0 0.0
    %733 = vmatpush1.msra.mxu0 0.0
    %734 = vmatprep.subr.mxu0 0.0
    %735 = vmatpush1.msra.mxu0 0.0
    %736 = vmatprep.subr.mxu0 0.0
    %737 = vmatpush1.msra.mxu0 0.0
    %738 = vmatprep.subr.mxu0 0.0
    %739 = vmatpush1.msra.mxu0 0.0
    %740 = vmatprep.subr.mxu0 0.0
    %741 = vmatpush1.msra.mxu0 0.0
    %742 = vmatprep.subr.mxu0 0.0
    %743 = vmatpush1.msra.mxu0 0.0
    %744 = vmatprep.subr.mxu0 0.0
    %745 = vmatpush1.msra.mxu0 0.0
    %746 = vmatprep.subr.mxu0 0.0
    %747 = vmatpush1.msra.mxu0 0.0
    %748 = vmatprep.subr.mxu0 0.0
    %749 = vmatpush1.msra.mxu0 0.0
    %750 = vmatprep.subr.mxu0 0.0
    %751 = vmatpush1.msra.mxu0 0.0
    %752 = vmatprep.subr.mxu0 0.0
    %753 = vmatpush1.msra.mxu0 0.0
    %754 = vmatprep.subr.mxu0 0.0
    %755 = vmatpush1.msra.mxu0 0.0
    %756 = vmatprep.subr.mxu0 0.0
    %757 = vmatpush1.msra.mxu0 0.0
    %758 = vmatprep.subr.mxu0 0.0
    %759 = vmatpush1.msra.mxu0 0.0
    %760 = vmatprep.subr.mxu0 0.0
    %761 = vmatpush1.msra.mxu0 0.0
    %762 = vmatprep.subr.mxu0 0.0
    %763 = vmatpush1.msra.mxu0 0.0
    %764 = vmatprep.subr.mxu0 0.0
    %765 = vmatpush1.msra.mxu0 0.0
    %766 = vmatprep.subr.mxu0 0.0
    %767 = vmatpush1.msra.mxu0 0.0
    %768 = vmatprep.subr.mxu0 0.0
    %769 = vmatpush1.msra.mxu0 0.0
    %770 = vmatprep.subr.mxu0 0.0
    %771 = vmatpush1.msra.mxu0 0.0
    %772 = vmatprep.subr.mxu0 0.0
    %773 = vmatpush1.msra.mxu0 0.0
    %774 = vmatprep.subr.mxu0 0.0
    %775 = vmatpush1.msra.mxu0 0.0
    %776 = vmatprep.subr.mxu0 0.0
    %777 = vmatpush1.msra.mxu0 0.0
    %778 = vmatprep.subr.mxu0 0.0
    %779 = vmatpush1.msra.mxu0 0.0
    %780 = vmatprep.subr.mxu0 0.0
    %781 = vmatpush1.msra.mxu0 0.0
    %782 = vmatprep.subr.mxu0 0.0
    %783 = vmatpush1.msra.mxu0 0.0
    %784 = vmatprep.subr.mxu0 0.0
    %785 = vmatpush1.msra.mxu0 0.0
    %786 = vmatprep.mubr.f32.mxu0 0.0
    %787 = vmatmul.mubr.f32.gmra.mrb[0].mxu0 %v720
    %v788 = vpop.f32.mrb[0].mxu0
    %v789 = vadd.f32 0.0, %v788
    %v790 = vpop.f32.mrb[0].mxu0
    %791 = vdwg.mxu0
    %792 = vrot.lane.b32.xlu0 %v159, 64
    %v793 = vpop.permute.xlu0 %792
    %v796 = vsel %vm519, %v563, 0
    %798 = vmatprep.subr.mxu0 0.0
    %799 = vmatpush1.msra.mxu0 %v793
    %800 = vmatprep.subr.mxu0 0.0
    %801 = vmatpush1.msra.mxu0 0.0
    %802 = vmatprep.subr.mxu0 0.0
    %803 = vmatpush1.msra.mxu0 0.0
    %804 = vmatprep.subr.mxu0 0.0
    %805 = vmatpush1.msra.mxu0 0.0
    %806 = vmatprep.subr.mxu0 0.0
    %807 = vmatpush1.msra.mxu0 0.0
    %808 = vmatprep.subr.mxu0 0.0
    %809 = vmatpush1.msra.mxu0 0.0
    %810 = vmatprep.subr.mxu0 0.0
    %811 = vmatpush1.msra.mxu0 0.0
    %812 = vmatprep.subr.mxu0 0.0
    %813 = vmatpush1.msra.mxu0 0.0
    %814 = vmatprep.subr.mxu0 0.0
    %815 = vmatpush1.msra.mxu0 0.0
    %816 = vmatprep.subr.mxu0 0.0
    %817 = vmatpush1.msra.mxu0 0.0
    %818 = vmatprep.subr.mxu0 0.0
    %819 = vmatpush1.msra.mxu0 0.0
    %820 = vmatprep.subr.mxu0 0.0
    %821 = vmatpush1.msra.mxu0 0.0
    %822 = vmatprep.subr.mxu0 0.0
    %823 = vmatpush1.msra.mxu0 0.0
    %824 = vmatprep.subr.mxu0 0.0
    %825 = vmatpush1.msra.mxu0 0.0
    %826 = vmatprep.subr.mxu0 0.0
    %827 = vmatpush1.msra.mxu0 0.0
    %828 = vmatprep.subr.mxu0 0.0
    %829 = vmatpush1.msra.mxu0 0.0
    %830 = vmatprep.subr.mxu0 0.0
    %831 = vmatpush1.msra.mxu0 0.0
    %832 = vmatprep.subr.mxu0 0.0
    %833 = vmatpush1.msra.mxu0 0.0
    %834 = vmatprep.subr.mxu0 0.0
    %835 = vmatpush1.msra.mxu0 0.0
    %836 = vmatprep.subr.mxu0 0.0
    %837 = vmatpush1.msra.mxu0 0.0
    %838 = vmatprep.subr.mxu0 0.0
    %839 = vmatpush1.msra.mxu0 0.0
    %840 = vmatprep.subr.mxu0 0.0
    %841 = vmatpush1.msra.mxu0 0.0
    %842 = vmatprep.subr.mxu0 0.0
    %843 = vmatpush1.msra.mxu0 0.0
    %844 = vmatprep.subr.mxu0 0.0
    %845 = vmatpush1.msra.mxu0 0.0
    %846 = vmatprep.subr.mxu0 0.0
    %847 = vmatpush1.msra.mxu0 0.0
    %848 = vmatprep.subr.mxu0 0.0
    %849 = vmatpush1.msra.mxu0 0.0
    %850 = vmatprep.subr.mxu0 0.0
    %851 = vmatpush1.msra.mxu0 0.0
    %852 = vmatprep.subr.mxu0 0.0
    %853 = vmatpush1.msra.mxu0 0.0
    %854 = vmatprep.subr.mxu0 0.0
    %855 = vmatpush1.msra.mxu0 0.0
    %856 = vmatprep.subr.mxu0 0.0
    %857 = vmatpush1.msra.mxu0 0.0
    %858 = vmatprep.subr.mxu0 0.0
    %859 = vmatpush1.msra.mxu0 0.0
    %860 = vmatprep.subr.mxu0 0.0
    %861 = vmatpush1.msra.mxu0 0.0
    %862 = vmatprep.mubr.f32.mxu0 0.0
    %863 = vmatmul.mubr.f32.gmra.mrb[0].mxu0 %v796
    %v864 = vpop.f32.mrb[0].mxu0
    %v865 = vadd.f32 0.0, %v864
    %v866 = vpop.f32.mrb[0].mxu0
    %867 = vdwg.mxu0
    %870 = vrot.lane.b32.xlu0 %v789, 16
    %v871 = vpop.permute.xlu0 %870
    %872 = vrot.lane.b32.xlu0 %v865, 16
    %v873 = vpop.permute.xlu0 %872
    %v876 = vsel %vm230, %v637, %v871
    %v877 = vsel %vm230, %v713, %v873
    %v878 = vlaneseq
    %v879 = vshrl.u32 %v878, 7
    %v880 = vsub.s32 1, %v879
    %v881 = vrot.slane %v67, %v880
    %v883 = vsel %vm72, %v876, 0
    %v886 = vsel %vm72, %v877, 0
    %888 = vmatprep.subr.mxu0 0.0
    %889 = vmatpush1.msra.mxu0 %v55
    %890 = vmatprep.subr.mxu0 0.0
    %891 = vmatpush1.msra.mxu0 %v56
    %892 = vmatprep.subr.mxu0 0.0
    %893 = vmatpush1.msra.mxu0 %v57
    %894 = vmatprep.subr.mxu0 0.0
    %895 = vmatpush1.msra.mxu0 %v58
    %896 = vmatprep.subr.mxu0 0.0
    %897 = vmatpush1.msra.mxu0 0.0
    %898 = vmatprep.subr.mxu0 0.0
    %899 = vmatpush1.msra.mxu0 0.0
    %900 = vmatprep.subr.mxu0 0.0
    %901 = vmatpush1.msra.mxu0 0.0
    %902 = vmatprep.subr.mxu0 0.0
    %903 = vmatpush1.msra.mxu0 0.0
    %904 = vmatprep.subr.mxu0 0.0
    %905 = vmatpush1.msra.mxu0 0.0
    %906 = vmatprep.subr.mxu0 0.0
    %907 = vmatpush1.msra.mxu0 0.0
    %908 = vmatprep.subr.mxu0 0.0
    %909 = vmatpush1.msra.mxu0 0.0
    %910 = vmatprep.subr.mxu0 0.0
    %911 = vmatpush1.msra.mxu0 0.0
    %912 = vmatprep.subr.mxu0 0.0
    %913 = vmatpush1.msra.mxu0 0.0
    %914 = vmatprep.subr.mxu0 0.0
    %915 = vmatpush1.msra.mxu0 0.0
    %916 = vmatprep.subr.mxu0 0.0
    %917 = vmatpush1.msra.mxu0 0.0
    %918 = vmatprep.subr.mxu0 0.0
    %919 = vmatpush1.msra.mxu0 0.0
    %920 = vmatprep.subr.mxu0 0.0
    %921 = vmatpush1.msra.mxu0 0.0
    %922 = vmatprep.subr.mxu0 0.0
    %923 = vmatpush1.msra.mxu0 0.0
    %924 = vmatprep.subr.mxu0 0.0
    %925 = vmatpush1.msra.mxu0 0.0
    %926 = vmatprep.subr.mxu0 0.0
    %927 = vmatpush1.msra.mxu0 0.0
    %928 = vmatprep.subr.mxu0 0.0
    %929 = vmatpush1.msra.mxu0 0.0
    %930 = vmatprep.subr.mxu0 0.0
    %931 = vmatpush1.msra.mxu0 0.0
    %932 = vmatprep.subr.mxu0 0.0
    %933 = vmatpush1.msra.mxu0 0.0
    %934 = vmatprep.subr.mxu0 0.0
    %935 = vmatpush1.msra.mxu0 0.0
    %936 = vmatprep.subr.mxu0 0.0
    %937 = vmatpush1.msra.mxu0 0.0
    %938 = vmatprep.subr.mxu0 0.0
    %939 = vmatpush1.msra.mxu0 0.0
    %940 = vmatprep.subr.mxu0 0.0
    %941 = vmatpush1.msra.mxu0 0.0
    %942 = vmatprep.subr.mxu0 0.0
    %943 = vmatpush1.msra.mxu0 0.0
    %944 = vmatprep.subr.mxu0 0.0
    %945 = vmatpush1.msra.mxu0 0.0
    %946 = vmatprep.subr.mxu0 0.0
    %947 = vmatpush1.msra.mxu0 0.0
    %948 = vmatprep.subr.mxu0 0.0
    %949 = vmatpush1.msra.mxu0 0.0
    %950 = vmatprep.subr.mxu0 0.0
    %951 = vmatpush1.msra.mxu0 0.0
    %952 = vmatprep.mubr.f32.mxu0 0.0
    %953 = vmatmul.mubr.f32.gmra.mrb[0].mxu0 %v883
    %v954 = vpop.f32.mrb[0].mxu0
    %v955 = vadd.f32 %v881, %v954
    %v956 = vpop.f32.mrb[0].mxu0
    %957 = vmatprep.mubr.f32.mxu0 0.0
    %958 = vmatmul.mubr.f32.gmra.mrb[0].mxu0 %v886
    %v959 = vpop.f32.mrb[0].mxu0
    %v960 = vadd.f32 %v881, %v959
    %v961 = vpop.f32.mrb[0].mxu0
    %962 = vdwg.mxu0
    %v963 = vadd.f32 %v955, %v27
    %v964 = vadd.f32 %v960, %v28
    %v965 = vsel %vm72, %v963, 0.0
    %966 = vadd.xlane.f32.xlu0 %v965
    %v967 = vpop.xlane.xlu0 %966
    %v968 = vsel %vm72, %v964, 0.0
    %969 = vadd.xlane.f32.xlu0 %v968
    %v970 = vpop.xlane.xlu0 %969
    %v971 = vrcp.pop 32.0
    %v972 = vmul.f32 %v967, %v971
    %v973 = vmul.f32 %v970, %v971
    %v974 = vmul.f32 %v963, %v963
    %v975 = vmul.f32 %v964, %v964
    %v976 = vsel %vm72, %v974, 0.0
    %977 = vadd.xlane.f32.xlu0 %v976
    %v978 = vpop.xlane.xlu0 %977
    %v979 = vsel %vm72, %v975, 0.0
    %980 = vadd.xlane.f32.xlu0 %v979
    %v981 = vpop.xlane.xlu0 %980
    %v982 = vmul.f32 %v978, %v971
    %v983 = vmul.f32 %v981, %v971
    %v984 = vmul.f32 %v972, %v972
    %v985 = vmul.f32 %v973, %v973
    %v986 = vsub.f32 %v982, %v984
    %v987 = vsub.f32 %v983, %v985
    %v988 = vsub.f32 %v963, %v972
    %v989 = vsub.f32 %v964, %v973
    %v990 = vadd.f32 %v986, 1e-05
    %v991 = vadd.f32 %v987, 1e-05
    %v992 = vrsqrt.pop %v990
    %v993 = vrsqrt.pop %v991
    %v994 = vmul.f32 %v988, %v992
    %v995 = vmul.f32 %v989, %v993
    %v996 = vlaneseq
    %v997 = vshrl.u32 %v996, 7
    %v998 = vsub.s32 2, %v997
    %v999 = vrot.slane %v67, %v998
    %v1000 = vmul.f32 %v994, %v999
    %v1001 = vmul.f32 %v995, %v999
    %v1002 = vlaneseq
    %v1003 = vshrl.u32 %v1002, 7
    %v1004 = vsub.s32 3, %v1003
    %v1005 = vrot.slane %v67, %v1004
    %v1006 = vadd.f32 %v1000, %v1005
    %v1007 = vadd.f32 %v1001, %v1005
    %v1008 = vlaneseq
    %v1009 = vshrl.u32 %v1008, 7
    %v1010 = vsub.s32 4, %v1009
    %v1011 = vrot.slane %v67, %v1010
    %v1013 = vsel %vm72, %v1006, 0
    %v1016 = vsel %vm72, %v1007, 0
    %1018 = vmatprep.subr.mxu0 0.0
    %1019 = vmatpush1.msra.mxu0 %v48
    %1020 = vmatprep.subr.mxu0 0.0
    %1021 = vmatpush1.msra.mxu0 %v50
    %1022 = vmatprep.subr.mxu0 0.0
    %1023 = vmatpush1.msra.mxu0 %v52
    %1024 = vmatprep.subr.mxu0 0.0
    %1025 = vmatpush1.msra.mxu0 %v54
    %1026 = vmatprep.subr.mxu0 0.0
    %1027 = vmatpush1.msra.mxu0 0.0
    %1028 = vmatprep.subr.mxu0 0.0
    %1029 = vmatpush1.msra.mxu0 0.0
    %1030 = vmatprep.subr.mxu0 0.0
    %1031 = vmatpush1.msra.mxu0 0.0
    %1032 = vmatprep.subr.mxu0 0.0
    %1033 = vmatpush1.msra.mxu0 0.0
    %1034 = vmatprep.subr.mxu0 0.0
    %1035 = vmatpush1.msra.mxu0 0.0
    %1036 = vmatprep.subr.mxu0 0.0
    %1037 = vmatpush1.msra.mxu0 0.0
    %1038 = vmatprep.subr.mxu0 0.0
    %1039 = vmatpush1.msra.mxu0 0.0
    %1040 = vmatprep.subr.mxu0 0.0
    %1041 = vmatpush1.msra.mxu0 0.0
    %1042 = vmatprep.subr.mxu0 0.0
    %1043 = vmatpush1.msra.mxu0 0.0
    %1044 = vmatprep.subr.mxu0 0.0
    %1045 = vmatpush1.msra.mxu0 0.0
    %1046 = vmatprep.subr.mxu0 0.0
    %1047 = vmatpush1.msra.mxu0 0.0
    %1048 = vmatprep.subr.mxu0 0.0
    %1049 = vmatpush1.msra.mxu0 0.0
    %1050 = vmatprep.subr.mxu0 0.0
    %1051 = vmatpush1.msra.mxu0 0.0
    %1052 = vmatprep.subr.mxu0 0.0
    %1053 = vmatpush1.msra.mxu0 0.0
    %1054 = vmatprep.subr.mxu0 0.0
    %1055 = vmatpush1.msra.mxu0 0.0
    %1056 = vmatprep.subr.mxu0 0.0
    %1057 = vmatpush1.msra.mxu0 0.0
    %1058 = vmatprep.subr.mxu0 0.0
    %1059 = vmatpush1.msra.mxu0 0.0
    %1060 = vmatprep.subr.mxu0 0.0
    %1061 = vmatpush1.msra.mxu0 0.0
    %1062 = vmatprep.subr.mxu0 0.0
    %1063 = vmatpush1.msra.mxu0 0.0
    %1064 = vmatprep.subr.mxu0 0.0
    %1065 = vmatpush1.msra.mxu0 0.0
    %1066 = vmatprep.subr.mxu0 0.0
    %1067 = vmatpush1.msra.mxu0 0.0
    %1068 = vmatprep.subr.mxu0 0.0
    %1069 = vmatpush1.msra.mxu0 0.0
    %1070 = vmatprep.subr.mxu0 0.0
    %1071 = vmatpush1.msra.mxu0 0.0
    %1072 = vmatprep.subr.mxu0 0.0
    %1073 = vmatpush1.msra.mxu0 0.0
    %1074 = vmatprep.subr.mxu0 0.0
    %1075 = vmatpush1.msra.mxu0 0.0
    %1076 = vmatprep.subr.mxu0 0.0
    %1077 = vmatpush1.msra.mxu0 0.0
    %1078 = vmatprep.subr.mxu0 0.0
    %1079 = vmatpush1.msra.mxu0 0.0
    %1080 = vmatprep.subr.mxu0 0.0
    %1081 = vmatpush1.msra.mxu0 0.0
    %1082 = vmatprep.mubr.f32.mxu0 0.0
    %1083 = vmatmul.mubr.f32.gmra.mrb[0].mxu0 %v1013
    %v1084 = vpop.f32.mrb[0].mxu0
    %v1085 = vadd.f32 %v1011, %v1084
    %v1086 = vpop.f32.mrb[0].mxu0
    %1087 = vmatprep.mubr.f32.mxu0 0.0
    %1088 = vmatmul.mubr.f32.gmra.mrb[0].mxu0 %v1016
    %v1089 = vpop.f32.mrb[0].mxu0
    %v1090 = vadd.f32 %v1011, %v1089
    %v1091 = vpop.f32.mrb[0].mxu0
    %1092 = vdwg.mxu0
    %v1093 = vmax.f32 %v1085, 0.0
    %v1094 = vmax.f32 %v1090, 0.0
    %v1095 = vlaneseq
    %v1096 = vshrl.u32 %v1095, 7
    %v1097 = vsub.s32 5, %v1096
    %v1098 = vrot.slane %v67, %v1097
    %vm1099 = vcmask 523264
    %v1101 = vsel %vm1099, %v1093, 0
    %v1104 = vsel %vm1099, %v1094, 0
    %1106 = vmatprep.subr.mxu0 0.0
    %1107 = vmatpush1.msra.mxu0 %v59
    %1108 = vmatprep.subr.mxu0 0.0
    %1109 = vmatpush1.msra.mxu0 %v60
    %1110 = vmatprep.subr.mxu0 0.0
    %1111 = vmatpush1.msra.mxu0 %v61
    %1112 = vmatprep.subr.mxu0 0.0
    %1113 = vmatpush1.msra.mxu0 %v62
    %1114 = vmatprep.subr.mxu0 0.0
    %1115 = vmatpush1.msra.mxu0 %v63
    %1116 = vmatprep.subr.mxu0 0.0
    %1117 = vmatpush1.msra.mxu0 %v64
    %1118 = vmatprep.subr.mxu0 0.0
    %1119 = vmatpush1.msra.mxu0 %v65
    %1120 = vmatprep.subr.mxu0 0.0
    %1121 = vmatpush1.msra.mxu0 %v66
    %1122 = vmatprep.subr.mxu0 0.0
    %1123 = vmatpush1.msra.mxu0 0.0
    %1124 = vmatprep.subr.mxu0 0.0
    %1125 = vmatpush1.msra.mxu0 0.0
    %1126 = vmatprep.subr.mxu0 0.0
    %1127 = vmatpush1.msra.mxu0 0.0
    %1128 = vmatprep.subr.mxu0 0.0
    %1129 = vmatpush1.msra.mxu0 0.0
    %1130 = vmatprep.subr.mxu0 0.0
    %1131 = vmatpush1.msra.mxu0 0.0
    %1132 = vmatprep.subr.mxu0 0.0
    %1133 = vmatpush1.msra.mxu0 0.0
    %1134 = vmatprep.subr.mxu0 0.0
    %1135 = vmatpush1.msra.mxu0 0.0
    %1136 = vmatprep.subr.mxu0 0.0
    %1137 = vmatpush1.msra.mxu0 0.0
    %1138 = vmatprep.subr.mxu0 0.0
    %1139 = vmatpush1.msra.mxu0 0.0
    %1140 = vmatprep.subr.mxu0 0.0
    %1141 = vmatpush1.msra.mxu0 0.0
    %1142 = vmatprep.subr.mxu0 0.0
    %1143 = vmatpush1.msra.mxu0 0.0
    %1144 = vmatprep.subr.mxu0 0.0
    %1145 = vmatpush1.msra.mxu0 0.0
    %1146 = vmatprep.subr.mxu0 0.0
    %1147 = vmatpush1.msra.mxu0 0.0
    %1148 = vmatprep.subr.mxu0 0.0
    %1149 = vmatpush1.msra.mxu0 0.0
    %1150 = vmatprep.subr.mxu0 0.0
    %1151 = vmatpush1.msra.mxu0 0.0
    %1152 = vmatprep.subr.mxu0 0.0
    %1153 = vmatpush1.msra.mxu0 0.0
    %1154 = vmatprep.subr.mxu0 0.0
    %1155 = vmatpush1.msra.mxu0 0.0
    %1156 = vmatprep.subr.mxu0 0.0
    %1157 = vmatpush1.msra.mxu0 0.0
    %1158 = vmatprep.subr.mxu0 0.0
    %1159 = vmatpush1.msra.mxu0 0.0
    %1160 = vmatprep.subr.mxu0 0.0
    %1161 = vmatpush1.msra.mxu0 0.0
    %1162 = vmatprep.subr.mxu0 0.0
    %1163 = vmatpush1.msra.mxu0 0.0
    %1164 = vmatprep.subr.mxu0 0.0
    %1165 = vmatpush1.msra.mxu0 0.0
    %1166 = vmatprep.subr.mxu0 0.0
    %1167 = vmatpush1.msra.mxu0 0.0
    %1168 = vmatprep.subr.mxu0 0.0
    %1169 = vmatpush1.msra.mxu0 0.0
    %1170 = vmatprep.mubr.f32.mxu0 0.0
    %1171 = vmatmul.mubr.f32.gmra.mrb[0].mxu0 %v1101
    %v1172 = vpop.f32.mrb[0].mxu0
    %v1173 = vadd.f32 %v1098, %v1172
    %v1174 = vpop.f32.mrb[0].mxu0
    %1175 = vmatprep.mubr.f32.mxu0 0.0
    %1176 = vmatmul.mubr.f32.gmra.mrb[0].mxu0 %v1104
    %v1177 = vpop.f32.mrb[0].mxu0
    %v1178 = vadd.f32 %v1098, %v1177
    %v1179 = vpop.f32.mrb[0].mxu0
    %1180 = vdwg.mxu0
    %v1181 = vadd.f32 %v1173, %v1006
    %v1182 = vadd.f32 %v1178, %v1007
    %v1183 = vsel %vm72, %v1181, 0.0
    %1184 = vadd.xlane.f32.xlu0 %v1183
    %v1185 = vpop.xlane.xlu0 %1184
    %v1186 = vsel %vm72, %v1182, 0.0
    %1187 = vadd.xlane.f32.xlu0 %v1186
    %v1188 = vpop.xlane.xlu0 %1187
    %v1189 = vmul.f32 %v1185, %v971
    %v1190 = vmul.f32 %v1188, %v971
    %v1191 = vmul.f32 %v1181, %v1181
    %v1192 = vmul.f32 %v1182, %v1182
    %v1193 = vsel %vm72, %v1191, 0.0
    %1194 = vadd.xlane.f32.xlu0 %v1193
    %v1195 = vpop.xlane.xlu0 %1194
    %v1196 = vsel %vm72, %v1192, 0.0
    %1197 = vadd.xlane.f32.xlu0 %v1196
    %v1198 = vpop.xlane.xlu0 %1197
    %v1199 = vmul.f32 %v1195, %v971
    %v1200 = vmul.f32 %v1198, %v971
    %v1201 = vmul.f32 %v1189, %v1189
    %v1202 = vmul.f32 %v1190, %v1190
    %v1203 = vsub.f32 %v1199, %v1201
    %v1204 = vsub.f32 %v1200, %v1202
    %v1205 = vsub.f32 %v1181, %v1189
    %v1206 = vsub.f32 %v1182, %v1190
    %v1207 = vadd.f32 %v1203, 1e-05
    %v1208 = vadd.f32 %v1204, 1e-05
    %v1209 = vrsqrt.pop %v1207
    %v1210 = vrsqrt.pop %v1208
    %v1211 = vmul.f32 %v1205, %v1209
    %v1212 = vmul.f32 %v1206, %v1210
    %v1213 = vlaneseq
    %v1214 = vshrl.u32 %v1213, 7
    %v1215 = vsub.s32 6, %v1214
    %v1216 = vrot.slane %v67, %v1215
    %v1217 = vmul.f32 %v1211, %v1216
    %v1218 = vmul.f32 %v1212, %v1216
    %v1219 = vlaneseq
    %v1220 = vshrl.u32 %v1219, 7
    %v1221 = vsub.s32 7, %v1220
    %v1222 = vrot.slane %v67, %v1221
    %v1223 = vadd.f32 %v1217, %v1222
    %v1224 = vadd.f32 %v1218, %v1222
    %s1225 = scalar_lea.vmem %s3, 64
    %v1226 = vld [vmem:[%s1225] sm:$0xff]
    %v1227 = vld [vmem:[%s1225 + $0x8] sm:$0xff]
    %v1228 = vld [vmem:[%s1225 + $0x10] sm:$0xff]
    %v1229 = vld [vmem:[%s1225 + $0x18] sm:$0xff]
    %v1230 = vld [vmem:[%s1225 + $0x20] sm:$0xff]
    %v1231 = vld [vmem:[%s1225 + $0x28] sm:$0xff]
    %v1232 = vld [vmem:[%s1225 + $0x30] sm:$0xff]
    %v1233 = vld [vmem:[%s1225 + $0x38] sm:$0xff]
    %s1234 = scalar_lea.vmem %s4, 96
    %v1235 = vld [vmem:[%s1234] sm:$0xff]
    %v1236 = vld [vmem:[%s1234 + $0x8] sm:$0xff]
    %v1237 = vld [vmem:[%s1234 + $0x10] sm:$0xff]
    %v1238 = vld [vmem:[%s1234 + $0x18] sm:$0xff]
    %v1239 = vld [vmem:[%s1234 + $0x20] sm:$0xff]
    %v1240 = vld [vmem:[%s1234 + $0x28] sm:$0xff]
    %v1241 = vld [vmem:[%s1234 + $0x30] sm:$0xff]
    %v1242 = vld [vmem:[%s1234 + $0x38] sm:$0xff]
    %v1243 = vld [vmem:[%s1234 + $0x40] sm:$0xff]
    %v1244 = vld [vmem:[%s1234 + $0x48] sm:$0xff]
    %v1245 = vld [vmem:[%s1234 + $0x50] sm:$0xff]
    %v1246 = vld [vmem:[%s1234 + $0x58] sm:$0xff]
    %s1247 = scalar_lea.vmem %s5, 8
    %v1248 = vld [vmem:[%s1247] sm:$0xff]
    %v1249 = vlaneseq
    %v1250 = vshrl.u32 %v1249, 7
    %v1251 = vsub.s32 0, %v1250
    %v1252 = vrot.slane %v1248, %v1251
    %v1254 = vsel %vm72, %v1223, 0
    %v1257 = vsel %vm72, %v1224, 0
    %1259 = vmatprep.subr.mxu0 0.0
    %1260 = vmatpush1.msra.mxu0 %v1226
    %1261 = vmatprep.subr.mxu0 0.0
    %1262 = vmatpush1.msra.mxu0 %v1228
    %1263 = vmatprep.subr.mxu0 0.0
    %1264 = vmatpush1.msra.mxu0 %v1230
    %1265 = vmatprep.subr.mxu0 0.0
    %1266 = vmatpush1.msra.mxu0 %v1232
    %1267 = vmatprep.subr.mxu0 0.0
    %1268 = vmatpush1.msra.mxu0 0.0
    %1269 = vmatprep.subr.mxu0 0.0
    %1270 = vmatpush1.msra.mxu0 0.0
    %1271 = vmatprep.subr.mxu0 0.0
    %1272 = vmatpush1.msra.mxu0 0.0
    %1273 = vmatprep.subr.mxu0 0.0
    %1274 = vmatpush1.msra.mxu0 0.0
    %1275 = vmatprep.subr.mxu0 0.0
    %1276 = vmatpush1.msra.mxu0 0.0
    %1277 = vmatprep.subr.mxu0 0.0
    %1278 = vmatpush1.msra.mxu0 0.0
    %1279 = vmatprep.subr.mxu0 0.0
    %1280 = vmatpush1.msra.mxu0 0.0
    %1281 = vmatprep.subr.mxu0 0.0
    %1282 = vmatpush1.msra.mxu0 0.0
    %1283 = vmatprep.subr.mxu0 0.0
    %1284 = vmatpush1.msra.mxu0 0.0
    %1285 = vmatprep.subr.mxu0 0.0
    %1286 = vmatpush1.msra.mxu0 0.0
    %1287 = vmatprep.subr.mxu0 0.0
    %1288 = vmatpush1.msra.mxu0 0.0
    %1289 = vmatprep.subr.mxu0 0.0
    %1290 = vmatpush1.msra.mxu0 0.0
    %1291 = vmatprep.subr.mxu0 0.0
    %1292 = vmatpush1.msra.mxu0 0.0
    %1293 = vmatprep.subr.mxu0 0.0
    %1294 = vmatpush1.msra.mxu0 0.0
    %1295 = vmatprep.subr.mxu0 0.0
    %1296 = vmatpush1.msra.mxu0 0.0
    %1297 = vmatprep.subr.mxu0 0.0
    %1298 = vmatpush1.msra.mxu0 0.0
    %1299 = vmatprep.subr.mxu0 0.0
    %1300 = vmatpush1.msra.mxu0 0.0
    %1301 = vmatprep.subr.mxu0 0.0
    %1302 = vmatpush1.msra.mxu0 0.0
    %1303 = vmatprep.subr.mxu0 0.0
    %1304 = vmatpush1.msra.mxu0 0.0
    %1305 = vmatprep.subr.mxu0 0.0
    %1306 = vmatpush1.msra.mxu0 0.0
    %1307 = vmatprep.subr.mxu0 0.0
    %1308 = vmatpush1.msra.mxu0 0.0
    %1309 = vmatprep.subr.mxu0 0.0
    %1310 = vmatpush1.msra.mxu0 0.0
    %1311 = vmatprep.subr.mxu0 0.0
    %1312 = vmatpush1.msra.mxu0 0.0
    %1313 = vmatprep.subr.mxu0 0.0
    %1314 = vmatpush1.msra.mxu0 0.0
    %1315 = vmatprep.subr.mxu0 0.0
    %1316 = vmatpush1.msra.mxu0 0.0
    %1317 = vmatprep.subr.mxu0 0.0
    %1318 = vmatpush1.msra.mxu0 0.0
    %1319 = vmatprep.subr.mxu0 0.0
    %1320 = vmatpush1.msra.mxu0 0.0
    %1321 = vmatprep.subr.mxu0 0.0
    %1322 = vmatpush1.msra.mxu0 0.0
    %1323 = vmatprep.mubr.f32.mxu0 0.0
    %1324 = vmatmul.mubr.f32.gmra.mrb[0].mxu0 %v1254
    %v1325 = vpop.f32.mrb[0].mxu0
    %v1326 = vadd.f32 %v1252, %v1325
    %v1327 = vpop.f32.mrb[0].mxu0
    %1328 = vmatprep.mubr.f32.mxu0 0.0
    %1329 = vmatmul.mubr.f32.gmra.mrb[0].mxu0 %v1257
    %v1330 = vpop.f32.mrb[0].mxu0
    %v1331 = vadd.f32 %v1252, %v1330
    %v1332 = vpop.f32.mrb[0].mxu0
    %1333 = vdwg.mxu0
    %1336 = vrot.lane.b32.xlu0 %v1326, 112
    %v1337 = vpop.permute.xlu0 %1336
    %1338 = vrot.lane.b32.xlu0 %v1331, 112
    %v1339 = vpop.permute.xlu0 %1338
    %1340 = vrot.lane.b32.xlu0 %v1326, 96
    %v1341 = vpop.permute.xlu0 %1340
    %1342 = vrot.lane.b32.xlu0 %v1331, 96
    %v1343 = vpop.permute.xlu0 %1342
    %1346 = vxpose.xlu0.b32.start [1/16] %v1341, 128
    %1347 = vxpose.xlu0.b32.cont [2/16] 0.0, 128
    %1348 = vxpose.xlu0.b32.cont [3/16] 0.0, 128
    %1349 = vxpose.xlu0.b32.cont [4/16] 0.0, 128
    %1350 = vxpose.xlu0.b32.cont [5/16] 0.0, 128
    %1351 = vxpose.xlu0.b32.cont [6/16] 0.0, 128
    %1352 = vxpose.xlu0.b32.cont [7/16] 0.0, 128
    %1353 = vxpose.xlu0.b32.cont [8/16] 0.0, 128
    %1354 = vxpose.xlu0.b32.cont [9/16] 0.0, 128
    %1355 = vxpose.xlu0.b32.cont [10/16] 0.0, 128
    %1356 = vxpose.xlu0.b32.cont [11/16] 0.0, 128
    %1357 = vxpose.xlu0.b32.cont [12/16] 0.0, 128
    %1358 = vxpose.xlu0.b32.cont [13/16] 0.0, 128
    %1359 = vxpose.xlu0.b32.cont [14/16] 0.0, 128
    %1360 = vxpose.xlu0.b32.cont [15/16] 0.0, 128
    %1361 = vxpose.xlu0.b32.end [16/16] 0.0, 128
    %v1362 = vpop.trf.xlu0
    %v1363 = vpop.trf.xlu0
    %v1364 = vpop.trf.xlu0
    %v1365 = vpop.trf.xlu0
    %v1366 = vpop.trf.xlu0
    %v1367 = vpop.trf.xlu0
    %v1368 = vpop.trf.xlu0
    %v1369 = vpop.trf.xlu0
    %v1370 = vpop.trf.xlu0
    %v1371 = vpop.trf.xlu0
    %v1372 = vpop.trf.xlu0
    %v1373 = vpop.trf.xlu0
    %v1374 = vpop.trf.xlu0
    %v1375 = vpop.trf.xlu0
    %v1376 = vpop.trf.xlu0
    %v1377 = vpop.trf.xlu0
    %1378 = vxpose.xlu0.b32.start [1/16] %v1343, 128
    %1379 = vxpose.xlu0.b32.cont [2/16] 0.0, 128
    %1380 = vxpose.xlu0.b32.cont [3/16] 0.0, 128
    %1381 = vxpose.xlu0.b32.cont [4/16] 0.0, 128
    %1382 = vxpose.xlu0.b32.cont [5/16] 0.0, 128
    %1383 = vxpose.xlu0.b32.cont [6/16] 0.0, 128
    %1384 = vxpose.xlu0.b32.cont [7/16] 0.0, 128
    %1385 = vxpose.xlu0.b32.cont [8/16] 0.0, 128
    %1386 = vxpose.xlu0.b32.cont [9/16] 0.0, 128
    %1387 = vxpose.xlu0.b32.cont [10/16] 0.0, 128
    %1388 = vxpose.xlu0.b32.cont [11/16] 0.0, 128
    %1389 = vxpose.xlu0.b32.cont [12/16] 0.0, 128
    %1390 = vxpose.xlu0.b32.cont [13/16] 0.0, 128
    %1391 = vxpose.xlu0.b32.cont [14/16] 0.0, 128
    %1392 = vxpose.xlu0.b32.cont [15/16] 0.0, 128
    %1393 = vxpose.xlu0.b32.end [16/16] 0.0, 128
    %v1394 = vpop.trf.xlu0
    %v1395 = vpop.trf.xlu0
    %v1396 = vpop.trf.xlu0
    %v1397 = vpop.trf.xlu0
    %v1398 = vpop.trf.xlu0
    %v1399 = vpop.trf.xlu0
    %v1400 = vpop.trf.xlu0
    %v1401 = vpop.trf.xlu0
    %v1402 = vpop.trf.xlu0
    %v1403 = vpop.trf.xlu0
    %v1404 = vpop.trf.xlu0
    %v1405 = vpop.trf.xlu0
    %v1406 = vpop.trf.xlu0
    %v1407 = vpop.trf.xlu0
    %v1408 = vpop.trf.xlu0
    %v1409 = vpop.trf.xlu0
    %v1410 = vsel %vm230, %v1326, 0
    %1412 = vmatprep.subr.mxu0 0.0
    %1413 = vmatpush1.msra.mxu0 %v1362
    %1414 = vmatprep.subr.mxu0 0.0
    %1415 = vmatpush1.msra.mxu0 %v1363
    %1416 = vmatprep.subr.mxu0 0.0
    %1417 = vmatpush1.msra.mxu0 0.0
    %1418 = vmatprep.subr.mxu0 0.0
    %1419 = vmatpush1.msra.mxu0 0.0
    %1420 = vmatprep.subr.mxu0 0.0
    %1421 = vmatpush1.msra.mxu0 0.0
    %1422 = vmatprep.subr.mxu0 0.0
    %1423 = vmatpush1.msra.mxu0 0.0
    %1424 = vmatprep.subr.mxu0 0.0
    %1425 = vmatpush1.msra.mxu0 0.0
    %1426 = vmatprep.subr.mxu0 0.0
    %1427 = vmatpush1.msra.mxu0 0.0
    %1428 = vmatprep.subr.mxu0 0.0
    %1429 = vmatpush1.msra.mxu0 0.0
    %1430 = vmatprep.subr.mxu0 0.0
    %1431 = vmatpush1.msra.mxu0 0.0
    %1432 = vmatprep.subr.mxu0 0.0
    %1433 = vmatpush1.msra.mxu0 0.0
    %1434 = vmatprep.subr.mxu0 0.0
    %1435 = vmatpush1.msra.mxu0 0.0
    %1436 = vmatprep.subr.mxu0 0.0
    %1437 = vmatpush1.msra.mxu0 0.0
    %1438 = vmatprep.subr.mxu0 0.0
    %1439 = vmatpush1.msra.mxu0 0.0
    %1440 = vmatprep.subr.mxu0 0.0
    %1441 = vmatpush1.msra.mxu0 0.0
    %1442 = vmatprep.subr.mxu0 0.0
    %1443 = vmatpush1.msra.mxu0 0.0
    %1444 = vmatprep.subr.mxu0 0.0
    %1445 = vmatpush1.msra.mxu0 0.0
    %1446 = vmatprep.subr.mxu0 0.0
    %1447 = vmatpush1.msra.mxu0 0.0
    %1448 = vmatprep.subr.mxu0 0.0
    %1449 = vmatpush1.msra.mxu0 0.0
    %1450 = vmatprep.subr.mxu0 0.0
    %1451 = vmatpush1.msra.mxu0 0.0
    %1452 = vmatprep.subr.mxu0 0.0
    %1453 = vmatpush1.msra.mxu0 0.0
    %1454 = vmatprep.subr.mxu0 0.0
    %1455 = vmatpush1.msra.mxu0 0.0
    %1456 = vmatprep.subr.mxu0 0.0
    %1457 = vmatpush1.msra.mxu0 0.0
    %1458 = vmatprep.subr.mxu0 0.0
    %1459 = vmatpush1.msra.mxu0 0.0
    %1460 = vmatprep.subr.mxu0 0.0
    %1461 = vmatpush1.msra.mxu0 0.0
    %1462 = vmatprep.subr.mxu0 0.0
    %1463 = vmatpush1.msra.mxu0 0.0
    %1464 = vmatprep.subr.mxu0 0.0
    %1465 = vmatpush1.msra.mxu0 0.0
    %1466 = vmatprep.subr.mxu0 0.0
    %1467 = vmatpush1.msra.mxu0 0.0
    %1468 = vmatprep.subr.mxu0 0.0
    %1469 = vmatpush1.msra.mxu0 0.0
    %1470 = vmatprep.subr.mxu0 0.0
    %1471 = vmatpush1.msra.mxu0 0.0
    %1472 = vmatprep.subr.mxu0 0.0
    %1473 = vmatpush1.msra.mxu0 0.0
    %1474 = vmatprep.subr.mxu0 0.0
    %1475 = vmatpush1.msra.mxu0 0.0
    %1476 = vmatprep.mubr.f32.mxu0 0.0
    %1477 = vmatmul.mubr.f32.gmra.mrb[0].mxu0 %v1410
    %v1478 = vpop.f32.mrb[0].mxu0
    %v1479 = vadd.f32 %v40, %v1478
    %v1480 = vpop.f32.mrb[0].mxu0
    %1481 = vdwg.mxu0
    %v1482 = vsel %vm230, %v1331, 0
    %1484 = vmatprep.subr.mxu0 0.0
    %1485 = vmatpush1.msra.mxu0 %v1394
    %1486 = vmatprep.subr.mxu0 0.0
    %1487 = vmatpush1.msra.mxu0 %v1395
    %1488 = vmatprep.subr.mxu0 0.0
    %1489 = vmatpush1.msra.mxu0 0.0
    %1490 = vmatprep.subr.mxu0 0.0
    %1491 = vmatpush1.msra.mxu0 0.0
    %1492 = vmatprep.subr.mxu0 0.0
    %1493 = vmatpush1.msra.mxu0 0.0
    %1494 = vmatprep.subr.mxu0 0.0
    %1495 = vmatpush1.msra.mxu0 0.0
    %1496 = vmatprep.subr.mxu0 0.0
    %1497 = vmatpush1.msra.mxu0 0.0
    %1498 = vmatprep.subr.mxu0 0.0
    %1499 = vmatpush1.msra.mxu0 0.0
    %1500 = vmatprep.subr.mxu0 0.0
    %1501 = vmatpush1.msra.mxu0 0.0
    %1502 = vmatprep.subr.mxu0 0.0
    %1503 = vmatpush1.msra.mxu0 0.0
    %1504 = vmatprep.subr.mxu0 0.0
    %1505 = vmatpush1.msra.mxu0 0.0
    %1506 = vmatprep.subr.mxu0 0.0
    %1507 = vmatpush1.msra.mxu0 0.0
    %1508 = vmatprep.subr.mxu0 0.0
    %1509 = vmatpush1.msra.mxu0 0.0
    %1510 = vmatprep.subr.mxu0 0.0
    %1511 = vmatpush1.msra.mxu0 0.0
    %1512 = vmatprep.subr.mxu0 0.0
    %1513 = vmatpush1.msra.mxu0 0.0
    %1514 = vmatprep.subr.mxu0 0.0
    %1515 = vmatpush1.msra.mxu0 0.0
    %1516 = vmatprep.subr.mxu0 0.0
    %1517 = vmatpush1.msra.mxu0 0.0
    %1518 = vmatprep.subr.mxu0 0.0
    %1519 = vmatpush1.msra.mxu0 0.0
    %1520 = vmatprep.subr.mxu0 0.0
    %1521 = vmatpush1.msra.mxu0 0.0
    %1522 = vmatprep.subr.mxu0 0.0
    %1523 = vmatpush1.msra.mxu0 0.0
    %1524 = vmatprep.subr.mxu0 0.0
    %1525 = vmatpush1.msra.mxu0 0.0
    %1526 = vmatprep.subr.mxu0 0.0
    %1527 = vmatpush1.msra.mxu0 0.0
    %1528 = vmatprep.subr.mxu0 0.0
    %1529 = vmatpush1.msra.mxu0 0.0
    %1530 = vmatprep.subr.mxu0 0.0
    %1531 = vmatpush1.msra.mxu0 0.0
    %1532 = vmatprep.subr.mxu0 0.0
    %1533 = vmatpush1.msra.mxu0 0.0
    %1534 = vmatprep.subr.mxu0 0.0
    %1535 = vmatpush1.msra.mxu0 0.0
    %1536 = vmatprep.subr.mxu0 0.0
    %1537 = vmatpush1.msra.mxu0 0.0
    %1538 = vmatprep.subr.mxu0 0.0
    %1539 = vmatpush1.msra.mxu0 0.0
    %1540 = vmatprep.subr.mxu0 0.0
    %1541 = vmatpush1.msra.mxu0 0.0
    %1542 = vmatprep.subr.mxu0 0.0
    %1543 = vmatpush1.msra.mxu0 0.0
    %1544 = vmatprep.subr.mxu0 0.0
    %1545 = vmatpush1.msra.mxu0 0.0
    %1546 = vmatprep.subr.mxu0 0.0
    %1547 = vmatpush1.msra.mxu0 0.0
    %1548 = vmatprep.mubr.f32.mxu0 0.0
    %1549 = vmatmul.mubr.f32.gmra.mrb[0].mxu0 %v1482
    %v1550 = vpop.f32.mrb[0].mxu0
    %v1551 = vadd.f32 %v44, %v1550
    %v1552 = vpop.f32.mrb[0].mxu0
    %1553 = vdwg.mxu0
    %v1554 = vsel %vm230, %v1337, 0
    %1556 = vmatprep.subr.mxu0 0.0
    %1557 = vmatpush1.msra.mxu0 %v1364
    %1558 = vmatprep.subr.mxu0 0.0
    %1559 = vmatpush1.msra.mxu0 %v1365
    %1560 = vmatprep.subr.mxu0 0.0
    %1561 = vmatpush1.msra.mxu0 0.0
    %1562 = vmatprep.subr.mxu0 0.0
    %1563 = vmatpush1.msra.mxu0 0.0
    %1564 = vmatprep.subr.mxu0 0.0
    %1565 = vmatpush1.msra.mxu0 0.0
    %1566 = vmatprep.subr.mxu0 0.0
    %1567 = vmatpush1.msra.mxu0 0.0
    %1568 = vmatprep.subr.mxu0 0.0
    %1569 = vmatpush1.msra.mxu0 0.0
    %1570 = vmatprep.subr.mxu0 0.0
    %1571 = vmatpush1.msra.mxu0 0.0
    %1572 = vmatprep.subr.mxu0 0.0
    %1573 = vmatpush1.msra.mxu0 0.0
    %1574 = vmatprep.subr.mxu0 0.0
    %1575 = vmatpush1.msra.mxu0 0.0
    %1576 = vmatprep.subr.mxu0 0.0
    %1577 = vmatpush1.msra.mxu0 0.0
    %1578 = vmatprep.subr.mxu0 0.0
    %1579 = vmatpush1.msra.mxu0 0.0
    %1580 = vmatprep.subr.mxu0 0.0
    %1581 = vmatpush1.msra.mxu0 0.0
    %1582 = vmatprep.subr.mxu0 0.0
    %1583 = vmatpush1.msra.mxu0 0.0
    %1584 = vmatprep.subr.mxu0 0.0
    %1585 = vmatpush1.msra.mxu0 0.0
    %1586 = vmatprep.subr.mxu0 0.0
    %1587 = vmatpush1.msra.mxu0 0.0
    %1588 = vmatprep.subr.mxu0 0.0
    %1589 = vmatpush1.msra.mxu0 0.0
    %1590 = vmatprep.subr.mxu0 0.0
    %1591 = vmatpush1.msra.mxu0 0.0
    %1592 = vmatprep.subr.mxu0 0.0
    %1593 = vmatpush1.msra.mxu0 0.0
    %1594 = vmatprep.subr.mxu0 0.0
    %1595 = vmatpush1.msra.mxu0 0.0
    %1596 = vmatprep.subr.mxu0 0.0
    %1597 = vmatpush1.msra.mxu0 0.0
    %1598 = vmatprep.subr.mxu0 0.0
    %1599 = vmatpush1.msra.mxu0 0.0
    %1600 = vmatprep.subr.mxu0 0.0
    %1601 = vmatpush1.msra.mxu0 0.0
    %1602 = vmatprep.subr.mxu0 0.0
    %1603 = vmatpush1.msra.mxu0 0.0
    %1604 = vmatprep.subr.mxu0 0.0
    %1605 = vmatpush1.msra.mxu0 0.0
    %1606 = vmatprep.subr.mxu0 0.0
    %1607 = vmatpush1.msra.mxu0 0.0
    %1608 = vmatprep.subr.mxu0 0.0
    %1609 = vmatpush1.msra.mxu0 0.0
    %1610 = vmatprep.subr.mxu0 0.0
    %1611 = vmatpush1.msra.mxu0 0.0
    %1612 = vmatprep.subr.mxu0 0.0
    %1613 = vmatpush1.msra.mxu0 0.0
    %1614 = vmatprep.subr.mxu0 0.0
    %1615 = vmatpush1.msra.mxu0 0.0
    %1616 = vmatprep.subr.mxu0 0.0
    %1617 = vmatpush1.msra.mxu0 0.0
    %1618 = vmatprep.subr.mxu0 0.0
    %1619 = vmatpush1.msra.mxu0 0.0
    %1620 = vmatprep.mubr.f32.mxu0 0.0
    %1621 = vmatmul.mubr.f32.gmra.mrb[0].mxu0 %v1554
    %v1622 = vpop.f32.mrb[0].mxu0
    %v1623 = vadd.f32 %v40, %v1622
    %v1624 = vpop.f32.mrb[0].mxu0
    %1625 = vdwg.mxu0
    %v1626 = vsel %vm230, %v1339, 0
    %1628 = vmatprep.subr.mxu0 0.0
    %1629 = vmatpush1.msra.mxu0 %v1396
    %1630 = vmatprep.subr.mxu0 0.0
    %1631 = vmatpush1.msra.mxu0 %v1397
    %1632 = vmatprep.subr.mxu0 0.0
    %1633 = vmatpush1.msra.mxu0 0.0
    %1634 = vmatprep.subr.mxu0 0.0
    %1635 = vmatpush1.msra.mxu0 0.0
    %1636 = vmatprep.subr.mxu0 0.0
    %1637 = vmatpush1.msra.mxu0 0.0
    %1638 = vmatprep.subr.mxu0 0.0
    %1639 = vmatpush1.msra.mxu0 0.0
    %1640 = vmatprep.subr.mxu0 0.0
    %1641 = vmatpush1.msra.mxu0 0.0
    %1642 = vmatprep.subr.mxu0 0.0
    %1643 = vmatpush1.msra.mxu0 0.0
    %1644 = vmatprep.subr.mxu0 0.0
    %1645 = vmatpush1.msra.mxu0 0.0
    %1646 = vmatprep.subr.mxu0 0.0
    %1647 = vmatpush1.msra.mxu0 0.0
    %1648 = vmatprep.subr.mxu0 0.0
    %1649 = vmatpush1.msra.mxu0 0.0
    %1650 = vmatprep.subr.mxu0 0.0
    %1651 = vmatpush1.msra.mxu0 0.0
    %1652 = vmatprep.subr.mxu0 0.0
    %1653 = vmatpush1.msra.mxu0 0.0
    %1654 = vmatprep.subr.mxu0 0.0
    %1655 = vmatpush1.msra.mxu0 0.0
    %1656 = vmatprep.subr.mxu0 0.0
    %1657 = vmatpush1.msra.mxu0 0.0
    %1658 = vmatprep.subr.mxu0 0.0
    %1659 = vmatpush1.msra.mxu0 0.0
    %1660 = vmatprep.subr.mxu0 0.0
    %1661 = vmatpush1.msra.mxu0 0.0
    %1662 = vmatprep.subr.mxu0 0.0
    %1663 = vmatpush1.msra.mxu0 0.0
    %1664 = vmatprep.subr.mxu0 0.0
    %1665 = vmatpush1.msra.mxu0 0.0
    %1666 = vmatprep.subr.mxu0 0.0
    %1667 = vmatpush1.msra.mxu0 0.0
    %1668 = vmatprep.subr.mxu0 0.0
    %1669 = vmatpush1.msra.mxu0 0.0
    %1670 = vmatprep.subr.mxu0 0.0
    %1671 = vmatpush1.msra.mxu0 0.0
    %1672 = vmatprep.subr.mxu0 0.0
    %1673 = vmatpush1.msra.mxu0 0.0
    %1674 = vmatprep.subr.mxu0 0.0
    %1675 = vmatpush1.msra.mxu0 0.0
    %1676 = vmatprep.subr.mxu0 0.0
    %1677 = vmatpush1.msra.mxu0 0.0
    %1678 = vmatprep.subr.mxu0 0.0
    %1679 = vmatpush1.msra.mxu0 0.0
    %1680 = vmatprep.subr.mxu0 0.0
    %1681 = vmatpush1.msra.mxu0 0.0
    %1682 = vmatprep.subr.mxu0 0.0
    %1683 = vmatpush1.msra.mxu0 0.0
    %1684 = vmatprep.subr.mxu0 0.0
    %1685 = vmatpush1.msra.mxu0 0.0
    %1686 = vmatprep.subr.mxu0 0.0
    %1687 = vmatpush1.msra.mxu0 0.0
    %1688 = vmatprep.subr.mxu0 0.0
    %1689 = vmatpush1.msra.mxu0 0.0
    %1690 = vmatprep.subr.mxu0 0.0
    %1691 = vmatpush1.msra.mxu0 0.0
    %1692 = vmatprep.mubr.f32.mxu0 0.0
    %1693 = vmatmul.mubr.f32.gmra.mrb[0].mxu0 %v1626
    %v1694 = vpop.f32.mrb[0].mxu0
    %v1695 = vadd.f32 %v44, %v1694
    %v1696 = vpop.f32.mrb[0].mxu0
    %1697 = vdwg.mxu0
    %v1698 = vsel %vm519, %v1479, -inf
    %1699 = vmax.xlane.f32.xlu0 %v1698
    %v1700 = vpop.xlane.xlu0 %1699
    %v1701 = vsel %vm519, %v1551, -inf
    %1702 = vmax.xlane.f32.xlu0 %v1701
    %v1703 = vpop.xlane.xlu0 %1702
    %v1704 = vsel %vm519, %v1623, -inf
    %1705 = vmax.xlane.f32.xlu0 %v1704
    %v1706 = vpop.xlane.xlu0 %1705
    %v1707 = vsel %vm519, %v1695, -inf
    %1708 = vmax.xlane.f32.xlu0 %v1707
    %v1709 = vpop.xlane.xlu0 %1708
    %v1710 = vsub.f32 %v1479, %v1700
    %v1711 = vsub.f32 %v1551, %v1703
    %v1712 = vsub.f32 %v1623, %v1706
    %v1713 = vsub.f32 %v1695, %v1709
    %v1714 = vmul.f32 %v1710, 1.442695
    %v1715 = vpow.pop %v1714
    %v1716 = vmul.f32 %v1711, 1.442695
    %v1717 = vpow.pop %v1716
    %v1718 = vmul.f32 %v1712, 1.442695
    %v1719 = vpow.pop %v1718
    %v1720 = vmul.f32 %v1713, 1.442695
    %v1721 = vpow.pop %v1720
    %v1722 = vsel %vm519, %v1715, 0.0
    %1723 = vadd.xlane.f32.xlu0 %v1722
    %v1724 = vpop.xlane.xlu0 %1723
    %v1725 = vsel %vm519, %v1717, 0.0
    %1726 = vadd.xlane.f32.xlu0 %v1725
    %v1727 = vpop.xlane.xlu0 %1726
    %v1728 = vsel %vm519, %v1719, 0.0
    %1729 = vadd.xlane.f32.xlu0 %v1728
    %v1730 = vpop.xlane.xlu0 %1729
    %v1731 = vsel %vm519, %v1721, 0.0
    %1732 = vadd.xlane.f32.xlu0 %v1731
    %v1733 = vpop.xlane.xlu0 %1732
    %v1734 = vrcp.pop %v1724
    %v1735 = vrcp.pop %v1727
    %v1736 = vrcp.pop %v1730
    %v1737 = vrcp.pop %v1733
    %v1738 = vmul.f32 %v1715, %v1734
    %v1739 = vmul.f32 %v1717, %v1735
    %v1740 = vmul.f32 %v1719, %v1736
    %v1741 = vmul.f32 %v1721, %v1737
    %1742 = vrot.lane.b32.xlu0 %v1326, 64
    %v1743 = vpop.permute.xlu0 %1742
    %v1746 = vsel %vm519, %v1738, 0
    %1748 = vmatprep.subr.mxu0 0.0
    %1749 = vmatpush1.msra.mxu0 %v1743
    %1750 = vmatprep.subr.mxu0 0.0
    %1751 = vmatpush1.msra.mxu0 0.0
    %1752 = vmatprep.subr.mxu0 0.0
    %1753 = vmatpush1.msra.mxu0 0.0
    %1754 = vmatprep.subr.mxu0 0.0
    %1755 = vmatpush1.msra.mxu0 0.0
    %1756 = vmatprep.subr.mxu0 0.0
    %1757 = vmatpush1.msra.mxu0 0.0
    %1758 = vmatprep.subr.mxu0 0.0
    %1759 = vmatpush1.msra.mxu0 0.0
    %1760 = vmatprep.subr.mxu0 0.0
    %1761 = vmatpush1.msra.mxu0 0.0
    %1762 = vmatprep.subr.mxu0 0.0
    %1763 = vmatpush1.msra.mxu0 0.0
    %1764 = vmatprep.subr.mxu0 0.0
    %1765 = vmatpush1.msra.mxu0 0.0
    %1766 = vmatprep.subr.mxu0 0.0
    %1767 = vmatpush1.msra.mxu0 0.0
    %1768 = vmatprep.subr.mxu0 0.0
    %1769 = vmatpush1.msra.mxu0 0.0
    %1770 = vmatprep.subr.mxu0 0.0
    %1771 = vmatpush1.msra.mxu0 0.0
    %1772 = vmatprep.subr.mxu0 0.0
    %1773 = vmatpush1.msra.mxu0 0.0
    %1774 = vmatprep.subr.mxu0 0.0
    %1775 = vmatpush1.msra.mxu0 0.0
    %1776 = vmatprep.subr.mxu0 0.0
    %1777 = vmatpush1.msra.mxu0 0.0
    %1778 = vmatprep.subr.mxu0 0.0
    %1779 = vmatpush1.msra.mxu0 0.0
    %1780 = vmatprep.subr.mxu0 0.0
    %1781 = vmatpush1.msra.mxu0 0.0
    %1782 = vmatprep.subr.mxu0 0.0
    %1783 = vmatpush1.msra.mxu0 0.0
    %1784 = vmatprep.subr.mxu0 0.0
    %1785 = vmatpush1.msra.mxu0 0.0
    %1786 = vmatprep.subr.mxu0 0.0
    %1787 = vmatpush1.msra.mxu0 0.0
    %1788 = vmatprep.subr.mxu0 0.0
    %1789 = vmatpush1.msra.mxu0 0.0
    %1790 = vmatprep.subr.mxu0 0.0
    %1791 = vmatpush1.msra.mxu0 0.0
    %1792 = vmatprep.subr.mxu0 0.0
    %1793 = vmatpush1.msra.mxu0 0.0
    %1794 = vmatprep.subr.mxu0 0.0
    %1795 = vmatpush1.msra.mxu0 0.0
    %1796 = vmatprep.subr.mxu0 0.0
    %1797 = vmatpush1.msra.mxu0 0.0
    %1798 = vmatprep.subr.mxu0 0.0
    %1799 = vmatpush1.msra.mxu0 0.0
    %1800 = vmatprep.subr.mxu0 0.0
    %1801 = vmatpush1.msra.mxu0 0.0
    %1802 = vmatprep.subr.mxu0 0.0
    %1803 = vmatpush1.msra.mxu0 0.0
    %1804 = vmatprep.subr.mxu0 0.0
    %1805 = vmatpush1.msra.mxu0 0.0
    %1806 = vmatprep.subr.mxu0 0.0
    %1807 = vmatpush1.msra.mxu0 0.0
    %1808 = vmatprep.subr.mxu0 0.0
    %1809 = vmatpush1.msra.mxu0 0.0
    %1810 = vmatprep.subr.mxu0 0.0
    %1811 = vmatpush1.msra.mxu0 0.0
    %1812 = vmatprep.mubr.f32.mxu0 0.0
    %1813 = vmatmul.mubr.f32.gmra.mrb[0].mxu0 %v1746
    %v1814 = vpop.f32.mrb[0].mxu0
    %v1815 = vadd.f32 0.0, %v1814
    %v1816 = vpop.f32.mrb[0].mxu0
    %1817 = vdwg.mxu0
    %1818 = vrot.lane.b32.xlu0 %v1331, 64
    %v1819 = vpop.permute.xlu0 %1818
    %v1822 = vsel %vm519, %v1739, 0
    %1824 = vmatprep.subr.mxu0 0.0
    %1825 = vmatpush1.msra.mxu0 %v1819
    %1826 = vmatprep.subr.mxu0 0.0
    %1827 = vmatpush1.msra.mxu0 0.0
    %1828 = vmatprep.subr.mxu0 0.0
    %1829 = vmatpush1.msra.mxu0 0.0
    %1830 = vmatprep.subr.mxu0 0.0
    %1831 = vmatpush1.msra.mxu0 0.0
    %1832 = vmatprep.subr.mxu0 0.0
    %1833 = vmatpush1.msra.mxu0 0.0
    %1834 = vmatprep.subr.mxu0 0.0
    %1835 = vmatpush1.msra.mxu0 0.0
    %1836 = vmatprep.subr.mxu0 0.0
    %1837 = vmatpush1.msra.mxu0 0.0
    %1838 = vmatprep.subr.mxu0 0.0
    %1839 = vmatpush1.msra.mxu0 0.0
    %1840 = vmatprep.subr.mxu0 0.0
    %1841 = vmatpush1.msra.mxu0 0.0
    %1842 = vmatprep.subr.mxu0 0.0
    %1843 = vmatpush1.msra.mxu0 0.0
    %1844 = vmatprep.subr.mxu0 0.0
    %1845 = vmatpush1.msra.mxu0 0.0
    %1846 = vmatprep.subr.mxu0 0.0
    %1847 = vmatpush1.msra.mxu0 0.0
    %1848 = vmatprep.subr.mxu0 0.0
    %1849 = vmatpush1.msra.mxu0 0.0
    %1850 = vmatprep.subr.mxu0 0.0
    %1851 = vmatpush1.msra.mxu0 0.0
    %1852 = vmatprep.subr.mxu0 0.0
    %1853 = vmatpush1.msra.mxu0 0.0
    %1854 = vmatprep.subr.mxu0 0.0
    %1855 = vmatpush1.msra.mxu0 0.0
    %1856 = vmatprep.subr.mxu0 0.0
    %1857 = vmatpush1.msra.mxu0 0.0
    %1858 = vmatprep.subr.mxu0 0.0
    %1859 = vmatpush1.msra.mxu0 0.0
    %1860 = vmatprep.subr.mxu0 0.0
    %1861 = vmatpush1.msra.mxu0 0.0
    %1862 = vmatprep.subr.mxu0 0.0
    %1863 = vmatpush1.msra.mxu0 0.0
    %1864 = vmatprep.subr.mxu0 0.0
    %1865 = vmatpush1.msra.mxu0 0.0
    %1866 = vmatprep.subr.mxu0 0.0
    %1867 = vmatpush1.msra.mxu0 0.0
    %1868 = vmatprep.subr.mxu0 0.0
    %1869 = vmatpush1.msra.mxu0 0.0
    %1870 = vmatprep.subr.mxu0 0.0
    %1871 = vmatpush1.msra.mxu0 0.0
    %1872 = vmatprep.subr.mxu0 0.0
    %1873 = vmatpush1.msra.mxu0 0.0
    %1874 = vmatprep.subr.mxu0 0.0
    %1875 = vmatpush1.msra.mxu0 0.0
    %1876 = vmatprep.subr.mxu0 0.0
    %1877 = vmatpush1.msra.mxu0 0.0
    %1878 = vmatprep.subr.mxu0 0.0
    %1879 = vmatpush1.msra.mxu0 0.0
    %1880 = vmatprep.subr.mxu0 0.0
    %1881 = vmatpush1.msra.mxu0 0.0
    %1882 = vmatprep.subr.mxu0 0.0
    %1883 = vmatpush1.msra.mxu0 0.0
    %1884 = vmatprep.subr.mxu0 0.0
    %1885 = vmatpush1.msra.mxu0 0.0
    %1886 = vmatprep.subr.mxu0 0.0
    %1887 = vmatpush1.msra.mxu0 0.0
    %1888 = vmatprep.mubr.f32.mxu0 0.0
    %1889 = vmatmul.mubr.f32.gmra.mrb[0].mxu0 %v1822
    %v1890 = vpop.f32.mrb[0].mxu0
    %v1891 = vadd.f32 0.0, %v1890
    %v1892 = vpop.f32.mrb[0].mxu0
    %1893 = vdwg.mxu0
    %1894 = vrot.lane.b32.xlu0 %v1337, 64
    %v1895 = vpop.permute.xlu0 %1894
    %v1898 = vsel %vm519, %v1740, 0
    %1900 = vmatprep.subr.mxu0 0.0
    %1901 = vmatpush1.msra.mxu0 %v1895
    %1902 = vmatprep.subr.mxu0 0.0
    %1903 = vmatpush1.msra.mxu0 0.0
    %1904 = vmatprep.subr.mxu0 0.0
    %1905 = vmatpush1.msra.mxu0 0.0
    %1906 = vmatprep.subr.mxu0 0.0
    %1907 = vmatpush1.msra.mxu0 0.0
    %1908 = vmatprep.subr.mxu0 0.0
    %1909 = vmatpush1.msra.mxu0 0.0
    %1910 = vmatprep.subr.mxu0 0.0
    %1911 = vmatpush1.msra.mxu0 0.0
    %1912 = vmatprep.subr.mxu0 0.0
    %1913 = vmatpush1.msra.mxu0 0.0
    %1914 = vmatprep.subr.mxu0 0.0
    %1915 = vmatpush1.msra.mxu0 0.0
    %1916 = vmatprep.subr.mxu0 0.0
    %1917 = vmatpush1.msra.mxu0 0.0
    %1918 = vmatprep.subr.mxu0 0.0
    %1919 = vmatpush1.msra.mxu0 0.0
    %1920 = vmatprep.subr.mxu0 0.0
    %1921 = vmatpush1.msra.mxu0 0.0
    %1922 = vmatprep.subr.mxu0 0.0
    %1923 = vmatpush1.msra.mxu0 0.0
    %1924 = vmatprep.subr.mxu0 0.0
    %1925 = vmatpush1.msra.mxu0 0.0
    %1926 = vmatprep.subr.mxu0 0.0
    %1927 = vmatpush1.msra.mxu0 0.0
    %1928 = vmatprep.subr.mxu0 0.0
    %1929 = vmatpush1.msra.mxu0 0.0
    %1930 = vmatprep.subr.mxu0 0.0
    %1931 = vmatpush1.msra.mxu0 0.0
    %1932 = vmatprep.subr.mxu0 0.0
    %1933 = vmatpush1.msra.mxu0 0.0
    %1934 = vmatprep.subr.mxu0 0.0
    %1935 = vmatpush1.msra.mxu0 0.0
    %1936 = vmatprep.subr.mxu0 0.0
    %1937 = vmatpush1.msra.mxu0 0.0
    %1938 = vmatprep.subr.mxu0 0.0
    %1939 = vmatpush1.msra.mxu0 0.0
    %1940 = vmatprep.subr.mxu0 0.0
    %1941 = vmatpush1.msra.mxu0 0.0
    %1942 = vmatprep.subr.mxu0 0.0
    %1943 = vmatpush1.msra.mxu0 0.0
    %1944 = vmatprep.subr.mxu0 0.0
    %1945 = vmatpush1.msra.mxu0 0.0
    %1946 = vmatprep.subr.mxu0 0.0
    %1947 = vmatpush1.msra.mxu0 0.0
    %1948 = vmatprep.subr.mxu0 0.0
    %1949 = vmatpush1.msra.mxu0 0.0
    %1950 = vmatprep.subr.mxu0 0.0
    %1951 = vmatpush1.msra.mxu0 0.0
    %1952 = vmatprep.subr.mxu0 0.0
    %1953 = vmatpush1.msra.mxu0 0.0
    %1954 = vmatprep.subr.mxu0 0.0
    %1955 = vmatpush1.msra.mxu0 0.0
    %1956 = vmatprep.subr.mxu0 0.0
    %1957 = vmatpush1.msra.mxu0 0.0
    %1958 = vmatprep.subr.mxu0 0.0
    %1959 = vmatpush1.msra.mxu0 0.0
    %1960 = vmatprep.subr.mxu0 0.0
    %1961 = vmatpush1.msra.mxu0 0.0
    %1962 = vmatprep.subr.mxu0 0.0
    %1963 = vmatpush1.msra.mxu0 0.0
    %1964 = vmatprep.mubr.f32.mxu0 0.0
    %1965 = vmatmul.mubr.f32.gmra.mrb[0].mxu0 %v1898
    %v1966 = vpop.f32.mrb[0].mxu0
    %v1967 = vadd.f32 0.0, %v1966
    %v1968 = vpop.f32.mrb[0].mxu0
    %1969 = vdwg.mxu0
    %1970 = vrot.lane.b32.xlu0 %v1339, 64
    %v1971 = vpop.permute.xlu0 %1970
    %v1974 = vsel %vm519, %v1741, 0
    %1976 = vmatprep.subr.mxu0 0.0
    %1977 = vmatpush1.msra.mxu0 %v1971
    %1978 = vmatprep.subr.mxu0 0.0
    %1979 = vmatpush1.msra.mxu0 0.0
    %1980 = vmatprep.subr.mxu0 0.0
    %1981 = vmatpush1.msra.mxu0 0.0
    %1982 = vmatprep.subr.mxu0 0.0
    %1983 = vmatpush1.msra.mxu0 0.0
    %1984 = vmatprep.subr.mxu0 0.0
    %1985 = vmatpush1.msra.mxu0 0.0
    %1986 = vmatprep.subr.mxu0 0.0
    %1987 = vmatpush1.msra.mxu0 0.0
    %1988 = vmatprep.subr.mxu0 0.0
    %1989 = vmatpush1.msra.mxu0 0.0
    %1990 = vmatprep.subr.mxu0 0.0
    %1991 = vmatpush1.msra.mxu0 0.0
    %1992 = vmatprep.subr.mxu0 0.0
    %1993 = vmatpush1.msra.mxu0 0.0
    %1994 = vmatprep.subr.mxu0 0.0
    %1995 = vmatpush1.msra.mxu0 0.0
    %1996 = vmatprep.subr.mxu0 0.0
    %1997 = vmatpush1.msra.mxu0 0.0
    %1998 = vmatprep.subr.mxu0 0.0
    %1999 = vmatpush1.msra.mxu0 0.0
    %2000 = vmatprep.subr.mxu0 0.0
    %2001 = vmatpush1.msra.mxu0 0.0
    %2002 = vmatprep.subr.mxu0 0.0
    %2003 = vmatpush1.msra.mxu0 0.0
    %2004 = vmatprep.subr.mxu0 0.0
    %2005 = vmatpush1.msra.mxu0 0.0
    %2006 = vmatprep.subr.mxu0 0.0
    %2007 = vmatpush1.msra.mxu0 0.0
    %2008 = vmatprep.subr.mxu0 0.0
    %2009 = vmatpush1.msra.mxu0 0.0
    %2010 = vmatprep.subr.mxu0 0.0
    %2011 = vmatpush1.msra.mxu0 0.0
    %2012 = vmatprep.subr.mxu0 0.0
    %2013 = vmatpush1.msra.mxu0 0.0
    %2014 = vmatprep.subr.mxu0 0.0
    %2015 = vmatpush1.msra.mxu0 0.0
    %2016 = vmatprep.subr.mxu0 0.0
    %2017 = vmatpush1.msra.mxu0 0.0
    %2018 = vmatprep.subr.mxu0 0.0
    %2019 = vmatpush1.msra.mxu0 0.0
    %2020 = vmatprep.subr.mxu0 0.0
    %2021 = vmatpush1.msra.mxu0 0.0
    %2022 = vmatprep.subr.mxu0 0.0
    %2023 = vmatpush1.msra.mxu0 0.0
    %2024 = vmatprep.subr.mxu0 0.0
    %2025 = vmatpush1.msra.mxu0 0.0
    %2026 = vmatprep.subr.mxu0 0.0
    %2027 = vmatpush1.msra.mxu0 0.0
    %2028 = vmatprep.subr.mxu0 0.0
    %2029 = vmatpush1.msra.mxu0 0.0
    %2030 = vmatprep.subr.mxu0 0.0
    %2031 = vmatpush1.msra.mxu0 0.0
    %2032 = vmatprep.subr.mxu0 0.0
    %2033 = vmatpush1.msra.mxu0 0.0
    %2034 = vmatprep.subr.mxu0 0.0
    %2035 = vmatpush1.msra.mxu0 0.0
    %2036 = vmatprep.subr.mxu0 0.0
    %2037 = vmatpush1.msra.mxu0 0.0
    %2038 = vmatprep.subr.mxu0 0.0
    %2039 = vmatpush1.msra.mxu0 0.0
    %2040 = vmatprep.mubr.f32.mxu0 0.0
    %2041 = vmatmul.mubr.f32.gmra.mrb[0].mxu0 %v1974
    %v2042 = vpop.f32.mrb[0].mxu0
    %v2043 = vadd.f32 0.0, %v2042
    %v2044 = vpop.f32.mrb[0].mxu0
    %2045 = vdwg.mxu0
    %2048 = vrot.lane.b32.xlu0 %v1967, 16
    %v2049 = vpop.permute.xlu0 %2048
    %2050 = vrot.lane.b32.xlu0 %v2043, 16
    %v2051 = vpop.permute.xlu0 %2050
    %v2054 = vsel %vm230, %v1815, %v2049
    %v2055 = vsel %vm230, %v1891, %v2051
    %v2056 = vlaneseq
    %v2057 = vshrl.u32 %v2056, 7
    %v2058 = vsub.s32 1, %v2057
    %v2059 = vrot.slane %v1248, %v2058
    %v2061 = vsel %vm72, %v2054, 0
    %v2064 = vsel %vm72, %v2055, 0
    %2066 = vmatprep.subr.mxu0 0.0
    %2067 = vmatpush1.msra.mxu0 %v1235
    %2068 = vmatprep.subr.mxu0 0.0
    %2069 = vmatpush1.msra.mxu0 %v1236
    %2070 = vmatprep.subr.mxu0 0.0
    %2071 = vmatpush1.msra.mxu0 %v1237
    %2072 = vmatprep.subr.mxu0 0.0
    %2073 = vmatpush1.msra.mxu0 %v1238
    %2074 = vmatprep.subr.mxu0 0.0
    %2075 = vmatpush1.msra.mxu0 0.0
    %2076 = vmatprep.subr.mxu0 0.0
    %2077 = vmatpush1.msra.mxu0 0.0
    %2078 = vmatprep.subr.mxu0 0.0
    %2079 = vmatpush1.msra.mxu0 0.0
    %2080 = vmatprep.subr.mxu0 0.0
    %2081 = vmatpush1.msra.mxu0 0.0
    %2082 = vmatprep.subr.mxu0 0.0
    %2083 = vmatpush1.msra.mxu0 0.0
    %2084 = vmatprep.subr.mxu0 0.0
    %2085 = vmatpush1.msra.mxu0 0.0
    %2086 = vmatprep.subr.mxu0 0.0
    %2087 = vmatpush1.msra.mxu0 0.0
    %2088 = vmatprep.subr.mxu0 0.0
    %2089 = vmatpush1.msra.mxu0 0.0
    %2090 = vmatprep.subr.mxu0 0.0
    %2091 = vmatpush1.msra.mxu0 0.0
    %2092 = vmatprep.subr.mxu0 0.0
    %2093 = vmatpush1.msra.mxu0 0.0
    %2094 = vmatprep.subr.mxu0 0.0
    %2095 = vmatpush1.msra.mxu0 0.0
    %2096 = vmatprep.subr.mxu0 0.0
    %2097 = vmatpush1.msra.mxu0 0.0
    %2098 = vmatprep.subr.mxu0 0.0
    %2099 = vmatpush1.msra.mxu0 0.0
    %2100 = vmatprep.subr.mxu0 0.0
    %2101 = vmatpush1.msra.mxu0 0.0
    %2102 = vmatprep.subr.mxu0 0.0
    %2103 = vmatpush1.msra.mxu0 0.0
    %2104 = vmatprep.subr.mxu0 0.0
    %2105 = vmatpush1.msra.mxu0 0.0
    %2106 = vmatprep.subr.mxu0 0.0
    %2107 = vmatpush1.msra.mxu0 0.0
    %2108 = vmatprep.subr.mxu0 0.0
    %2109 = vmatpush1.msra.mxu0 0.0
    %2110 = vmatprep.subr.mxu0 0.0
    %2111 = vmatpush1.msra.mxu0 0.0
    %2112 = vmatprep.subr.mxu0 0.0
    %2113 = vmatpush1.msra.mxu0 0.0
    %2114 = vmatprep.subr.mxu0 0.0
    %2115 = vmatpush1.msra.mxu0 0.0
    %2116 = vmatprep.subr.mxu0 0.0
    %2117 = vmatpush1.msra.mxu0 0.0
    %2118 = vmatprep.subr.mxu0 0.0
    %2119 = vmatpush1.msra.mxu0 0.0
    %2120 = vmatprep.subr.mxu0 0.0
    %2121 = vmatpush1.msra.mxu0 0.0
    %2122 = vmatprep.subr.mxu0 0.0
    %2123 = vmatpush1.msra.mxu0 0.0
    %2124 = vmatprep.subr.mxu0 0.0
    %2125 = vmatpush1.msra.mxu0 0.0
    %2126 = vmatprep.subr.mxu0 0.0
    %2127 = vmatpush1.msra.mxu0 0.0
    %2128 = vmatprep.subr.mxu0 0.0
    %2129 = vmatpush1.msra.mxu0 0.0
    %2130 = vmatprep.mubr.f32.mxu0 0.0
    %2131 = vmatmul.mubr.f32.gmra.mrb[0].mxu0 %v2061
    %v2132 = vpop.f32.mrb[0].mxu0
    %v2133 = vadd.f32 %v2059, %v2132
    %v2134 = vpop.f32.mrb[0].mxu0
    %2135 = vmatprep.mubr.f32.mxu0 0.0
    %2136 = vmatmul.mubr.f32.gmra.mrb[0].mxu0 %v2064
    %v2137 = vpop.f32.mrb[0].mxu0
    %v2138 = vadd.f32 %v2059, %v2137
    %v2139 = vpop.f32.mrb[0].mxu0
    %2140 = vdwg.mxu0
    %v2141 = vadd.f32 %v2133, %v1223
    %v2142 = vadd.f32 %v2138, %v1224
    %v2143 = vsel %vm72, %v2141, 0.0
    %2144 = vadd.xlane.f32.xlu0 %v2143
    %v2145 = vpop.xlane.xlu0 %2144
    %v2146 = vsel %vm72, %v2142, 0.0
    %2147 = vadd.xlane.f32.xlu0 %v2146
    %v2148 = vpop.xlane.xlu0 %2147
    %v2149 = vmul.f32 %v2145, %v971
    %v2150 = vmul.f32 %v2148, %v971
    %v2151 = vmul.f32 %v2141, %v2141
    %v2152 = vmul.f32 %v2142, %v2142
    %v2153 = vsel %vm72, %v2151, 0.0
    %2154 = vadd.xlane.f32.xlu0 %v2153
    %v2155 = vpop.xlane.xlu0 %2154
    %v2156 = vsel %vm72, %v2152, 0.0
    %2157 = vadd.xlane.f32.xlu0 %v2156
    %v2158 = vpop.xlane.xlu0 %2157
    %v2159 = vmul.f32 %v2155, %v971
    %v2160 = vmul.f32 %v2158, %v971
    %v2161 = vmul.f32 %v2149, %v2149
    %v2162 = vmul.f32 %v2150, %v2150
    %v2163 = vsub.f32 %v2159, %v2161
    %v2164 = vsub.f32 %v2160, %v2162
    %v2165 = vsub.f32 %v2141, %v2149
    %v2166 = vsub.f32 %v2142, %v2150
    %v2167 = vadd.f32 %v2163, 1e-05
    %v2168 = vadd.f32 %v2164, 1e-05
    %v2169 = vrsqrt.pop %v2167
    %v2170 = vrsqrt.pop %v2168
    %v2171 = vmul.f32 %v2165, %v2169
    %v2172 = vmul.f32 %v2166, %v2170
    %v2173 = vlaneseq
    %v2174 = vshrl.u32 %v2173, 7
    %v2175 = vsub.s32 2, %v2174
    %v2176 = vrot.slane %v1248, %v2175
    %v2177 = vmul.f32 %v2171, %v2176
    %v2178 = vmul.f32 %v2172, %v2176
    %v2179 = vlaneseq
    %v2180 = vshrl.u32 %v2179, 7
    %v2181 = vsub.s32 3, %v2180
    %v2182 = vrot.slane %v1248, %v2181
    %v2183 = vadd.f32 %v2177, %v2182
    %v2184 = vadd.f32 %v2178, %v2182
    %v2185 = vlaneseq
    %v2186 = vshrl.u32 %v2185, 7
    %v2187 = vsub.s32 4, %v2186
    %v2188 = vrot.slane %v1248, %v2187
    %v2190 = vsel %vm72, %v2183, 0
    %v2193 = vsel %vm72, %v2184, 0
    %2195 = vmatprep.subr.mxu0 0.0
    %2196 = vmatpush1.msra.mxu0 %v1227
    %2197 = vmatprep.subr.mxu0 0.0
    %2198 = vmatpush1.msra.mxu0 %v1229
    %2199 = vmatprep.subr.mxu0 0.0
    %2200 = vmatpush1.msra.mxu0 %v1231
    %2201 = vmatprep.subr.mxu0 0.0
    %2202 = vmatpush1.msra.mxu0 %v1233
    %2203 = vmatprep.subr.mxu0 0.0
    %2204 = vmatpush1.msra.mxu0 0.0
    %2205 = vmatprep.subr.mxu0 0.0
    %2206 = vmatpush1.msra.mxu0 0.0
    %2207 = vmatprep.subr.mxu0 0.0
    %2208 = vmatpush1.msra.mxu0 0.0
    %2209 = vmatprep.subr.mxu0 0.0
    %2210 = vmatpush1.msra.mxu0 0.0
    %2211 = vmatprep.subr.mxu0 0.0
    %2212 = vmatpush1.msra.mxu0 0.0
    %2213 = vmatprep.subr.mxu0 0.0
    %2214 = vmatpush1.msra.mxu0 0.0
    %2215 = vmatprep.subr.mxu0 0.0
    %2216 = vmatpush1.msra.mxu0 0.0
    %2217 = vmatprep.subr.mxu0 0.0
    %2218 = vmatpush1.msra.mxu0 0.0
    %2219 = vmatprep.subr.mxu0 0.0
    %2220 = vmatpush1.msra.mxu0 0.0
    %2221 = vmatprep.subr.mxu0 0.0
    %2222 = vmatpush1.msra.mxu0 0.0
    %2223 = vmatprep.subr.mxu0 0.0
    %2224 = vmatpush1.msra.mxu0 0.0
    %2225 = vmatprep.subr.mxu0 0.0
    %2226 = vmatpush1.msra.mxu0 0.0
    %2227 = vmatprep.subr.mxu0 0.0
    %2228 = vmatpush1.msra.mxu0 0.0
    %2229 = vmatprep.subr.mxu0 0.0
    %2230 = vmatpush1.msra.mxu0 0.0
    %2231 = vmatprep.subr.mxu0 0.0
    %2232 = vmatpush1.msra.mxu0 0.0
    %2233 = vmatprep.subr.mxu0 0.0
    %2234 = vmatpush1.msra.mxu0 0.0
    %2235 = vmatprep.subr.mxu0 0.0
    %2236 = vmatpush1.msra.mxu0 0.0
    %2237 = vmatprep.subr.mxu0 0.0
    %2238 = vmatpush1.msra.mxu0 0.0
    %2239 = vmatprep.subr.mxu0 0.0
    %2240 = vmatpush1.msra.mxu0 0.0
    %2241 = vmatprep.subr.mxu0 0.0
    %2242 = vmatpush1.msra.mxu0 0.0
    %2243 = vmatprep.subr.mxu0 0.0
    %2244 = vmatpush1.msra.mxu0 0.0
    %2245 = vmatprep.subr.mxu0 0.0
    %2246 = vmatpush1.msra.mxu0 0.0
    %2247 = vmatprep.subr.mxu0 0.0
    %2248 = vmatpush1.msra.mxu0 0.0
    %2249 = vmatprep.subr.mxu0 0.0
    %2250 = vmatpush1.msra.mxu0 0.0
    %2251 = vmatprep.subr.mxu0 0.0
    %2252 = vmatpush1.msra.mxu0 0.0
    %2253 = vmatprep.subr.mxu0 0.0
    %2254 = vmatpush1.msra.mxu0 0.0
    %2255 = vmatprep.subr.mxu0 0.0
    %2256 = vmatpush1.msra.mxu0 0.0
    %2257 = vmatprep.subr.mxu0 0.0
    %2258 = vmatpush1.msra.mxu0 0.0
    %2259 = vmatprep.mubr.f32.mxu0 0.0
    %2260 = vmatmul.mubr.f32.gmra.mrb[0].mxu0 %v2190
    %v2261 = vpop.f32.mrb[0].mxu0
    %v2262 = vadd.f32 %v2188, %v2261
    %v2263 = vpop.f32.mrb[0].mxu0
    %2264 = vmatprep.mubr.f32.mxu0 0.0
    %2265 = vmatmul.mubr.f32.gmra.mrb[0].mxu0 %v2193
    %v2266 = vpop.f32.mrb[0].mxu0
    %v2267 = vadd.f32 %v2188, %v2266
    %v2268 = vpop.f32.mrb[0].mxu0
    %2269 = vdwg.mxu0
    %v2270 = vmax.f32 %v2262, 0.0
    %v2271 = vmax.f32 %v2267, 0.0
    %v2272 = vlaneseq
    %v2273 = vshrl.u32 %v2272, 7
    %v2274 = vsub.s32 5, %v2273
    %v2275 = vrot.slane %v1248, %v2274
    %v2277 = vsel %vm1099, %v2270, 0
    %v2280 = vsel %vm1099, %v2271, 0
    %2282 = vmatprep.subr.mxu0 0.0
    %2283 = vmatpush1.msra.mxu0 %v1239
    %2284 = vmatprep.subr.mxu0 0.0
    %2285 = vmatpush1.msra.mxu0 %v1240
    %2286 = vmatprep.subr.mxu0 0.0
    %2287 = vmatpush1.msra.mxu0 %v1241
    %2288 = vmatprep.subr.mxu0 0.0
    %2289 = vmatpush1.msra.mxu0 %v1242
    %2290 = vmatprep.subr.mxu0 0.0
    %2291 = vmatpush1.msra.mxu0 %v1243
    %2292 = vmatprep.subr.mxu0 0.0
    %2293 = vmatpush1.msra.mxu0 %v1244
    %2294 = vmatprep.subr.mxu0 0.0
    %2295 = vmatpush1.msra.mxu0 %v1245
    %2296 = vmatprep.subr.mxu0 0.0
    %2297 = vmatpush1.msra.mxu0 %v1246
    %2298 = vmatprep.subr.mxu0 0.0
    %2299 = vmatpush1.msra.mxu0 0.0
    %2300 = vmatprep.subr.mxu0 0.0
    %2301 = vmatpush1.msra.mxu0 0.0
    %2302 = vmatprep.subr.mxu0 0.0
    %2303 = vmatpush1.msra.mxu0 0.0
    %2304 = vmatprep.subr.mxu0 0.0
    %2305 = vmatpush1.msra.mxu0 0.0
    %2306 = vmatprep.subr.mxu0 0.0
    %2307 = vmatpush1.msra.mxu0 0.0
    %2308 = vmatprep.subr.mxu0 0.0
    %2309 = vmatpush1.msra.mxu0 0.0
    %2310 = vmatprep.subr.mxu0 0.0
    %2311 = vmatpush1.msra.mxu0 0.0
    %2312 = vmatprep.subr.mxu0 0.0
    %2313 = vmatpush1.msra.mxu0 0.0
    %2314 = vmatprep.subr.mxu0 0.0
    %2315 = vmatpush1.msra.mxu0 0.0
    %2316 = vmatprep.subr.mxu0 0.0
    %2317 = vmatpush1.msra.mxu0 0.0
    %2318 = vmatprep.subr.mxu0 0.0
    %2319 = vmatpush1.msra.mxu0 0.0
    %2320 = vmatprep.subr.mxu0 0.0
    %2321 = vmatpush1.msra.mxu0 0.0
    %2322 = vmatprep.subr.mxu0 0.0
    %2323 = vmatpush1.msra.mxu0 0.0
    %2324 = vmatprep.subr.mxu0 0.0
    %2325 = vmatpush1.msra.mxu0 0.0
    %2326 = vmatprep.subr.mxu0 0.0
    %2327 = vmatpush1.msra.mxu0 0.0
    %2328 = vmatprep.subr.mxu0 0.0
    %2329 = vmatpush1.msra.mxu0 0.0
    %2330 = vmatprep.subr.mxu0 0.0
    %2331 = vmatpush1.msra.mxu0 0.0
    %2332 = vmatprep.subr.mxu0 0.0
    %2333 = vmatpush1.msra.mxu0 0.0
    %2334 = vmatprep.subr.mxu0 0.0
    %2335 = vmatpush1.msra.mxu0 0.0
    %2336 = vmatprep.subr.mxu0 0.0
    %2337 = vmatpush1.msra.mxu0 0.0
    %2338 = vmatprep.subr.mxu0 0.0
    %2339 = vmatpush1.msra.mxu0 0.0
    %2340 = vmatprep.subr.mxu0 0.0
    %2341 = vmatpush1.msra.mxu0 0.0
    %2342 = vmatprep.subr.mxu0 0.0
    %2343 = vmatpush1.msra.mxu0 0.0
    %2344 = vmatprep.subr.mxu0 0.0
    %2345 = vmatpush1.msra.mxu0 0.0
    %2346 = vmatprep.mubr.f32.mxu0 0.0
    %2347 = vmatmul.mubr.f32.gmra.mrb[0].mxu0 %v2277
    %v2348 = vpop.f32.mrb[0].mxu0
    %v2349 = vadd.f32 %v2275, %v2348
    %v2350 = vpop.f32.mrb[0].mxu0
    %2351 = vmatprep.mubr.f32.mxu0 0.0
    %2352 = vmatmul.mubr.f32.gmra.mrb[0].mxu0 %v2280
    %v2353 = vpop.f32.mrb[0].mxu0
    %v2354 = vadd.f32 %v2275, %v2353
    %v2355 = vpop.f32.mrb[0].mxu0
    %2356 = vdwg.mxu0
    %v2357 = vadd.f32 %v2349, %v2183
    %v2358 = vadd.f32 %v2354, %v2184
    %v2359 = vsel %vm72, %v2357, 0.0
    %2360 = vadd.xlane.f32.xlu0 %v2359
    %v2361 = vpop.xlane.xlu0 %2360
    %v2362 = vsel %vm72, %v2358, 0.0
    %2363 = vadd.xlane.f32.xlu0 %v2362
    %v2364 = vpop.xlane.xlu0 %2363
    %v2365 = vmul.f32 %v2361, %v971
    %v2366 = vmul.f32 %v2364, %v971
    %v2367 = vmul.f32 %v2357, %v2357
    %v2368 = vmul.f32 %v2358, %v2358
    %v2369 = vsel %vm72, %v2367, 0.0
    %2370 = vadd.xlane.f32.xlu0 %v2369
    %v2371 = vpop.xlane.xlu0 %2370
    %v2372 = vsel %vm72, %v2368, 0.0
    %2373 = vadd.xlane.f32.xlu0 %v2372
    %v2374 = vpop.xlane.xlu0 %2373
    %v2375 = vmul.f32 %v2371, %v971
    %v2376 = vmul.f32 %v2374, %v971
    %v2377 = vmul.f32 %v2365, %v2365
    %v2378 = vmul.f32 %v2366, %v2366
    %v2379 = vsub.f32 %v2375, %v2377
    %v2380 = vsub.f32 %v2376, %v2378
    %v2381 = vsub.f32 %v2357, %v2365
    %v2382 = vsub.f32 %v2358, %v2366
    %v2383 = vadd.f32 %v2379, 1e-05
    %v2384 = vadd.f32 %v2380, 1e-05
    %v2385 = vrsqrt.pop %v2383
    %v2386 = vrsqrt.pop %v2384
    %v2387 = vmul.f32 %v2381, %v2385
    %v2388 = vmul.f32 %v2382, %v2386
    %v2389 = vlaneseq
    %v2390 = vshrl.u32 %v2389, 7
    %v2391 = vsub.s32 6, %v2390
    %v2392 = vrot.slane %v1248, %v2391
    %v2393 = vmul.f32 %v2387, %v2392
    %v2394 = vmul.f32 %v2388, %v2392
    %v2395 = vlaneseq
    %v2396 = vshrl.u32 %v2395, 7
    %v2397 = vsub.s32 7, %v2396
    %v2398 = vrot.slane %v1248, %v2397
    %v2399 = vadd.f32 %v2393, %v2398
    %v2400 = vadd.f32 %v2394, %v2398
    %2401 = vst.msk [vmem:[#allocation2] sm:$0xff] %vm72, %v2399
    %2402 = vst.msk [vmem:[#allocation2 + $0x8] sm:$0xff] %vm72, %v2400
    // Predicated region
    $region26: #{encoder_forward.1} parent=1 // pred_check
      _
    $region27: #{encoder_forward.1} parent=1 // pred_check_branch
      %2404 = sbr.rel (0) target = $region29
    $region28: #{encoder_forward.1} parent=1 // pred_region
      %s2406 = ssub.s32 256, 256
      %2407 = vsyncadd [#allocation3], %s2406
      %s2408 = sshll.u32 [#allocation2], 4
      %s2409 = int_to_ptr.vmem [resolvable:$true] %s2408
      %2414 = dma.vmem_to_hbm [thread:$0]  %s2409, 256, %s6, [#allocation3], 128, 128, 8
    $region29: #{encoder_forward.1} parent=1 // pred_fallthru
      _
    // Predicated region
    $region30: #{encoder_forward.1} parent=1 // pred_check
      _
    $region31: #{encoder_forward.1} parent=1 // pred_check_branch
      %2416 = sbr.rel (0) target = $region33
    $region32: #{encoder_forward.1} parent=1 // pred_region
      %2417 = dma.done [#allocation3], 256
    $region33: #{encoder_forward.1} parent=1 // pred_fallthru
      _
    %2418 = vsyncpa [#allocation3], 1

</llo_original>
